<compile_context>
chip_gen: v7x
topology: tpu7x:2x2x1
jax: 0.10.0
libtpu: 0.0.40
codegen_flags: <defaults>
</compile_context>

<pallas_src>
import jax
import jax.numpy as jnp
from jax.experimental import pallas as pl
from jax.experimental.pallas import tpu as pltpu

# ---- problem sizes (small, consistent with the module) ----
BATCH = 2
N = 8           # sequence length
IN_DIM = 32     # input_dim
DIM_K = 32      # dim_k
DIM_V = 32      # dim_v
NUM_HEADS = 4
DK = DIM_K // NUM_HEADS
DV = DIM_V // NUM_HEADS
NORM_FACT = 1.0 / (DIM_K ** 0.5)
EPS = 1e-12     # F.normalize default eps


def self_attention_kernel(c_ref, u_ref, adj_ref, w_ref, b_ref,
                          att_ref, weight_ref):
    # ---- x = F.normalize(c + u, dim=-1); rows are (batch*seq) on sublanes ----
    x = c_ref[...] + u_ref[...]                                  # (B*N, IN_DIM)
    ss = jnp.sum(x * x, axis=-1, keepdims=True)
    # max(||x||, eps) == sqrt(max(||x||^2, eps^2)); rsqrt runs on the EUP.
    x = x * jax.lax.rsqrt(jnp.maximum(ss, EPS * EPS))

    # ---- fused QKV projection: one MXU matmul for the whole batch ----
    qkv = jnp.dot(x, w_ref[...], preferred_element_type=jnp.float32) + b_ref[...]

    q = qkv[:, :DIM_K] * NORM_FACT            # fold 1/sqrt(dim_k) once into q
    k = qkv[:, DIM_K:2 * DIM_K]
    v = qkv[:, 2 * DIM_K:2 * DIM_K + DIM_V]

    # split batch back out of the sublane axis (16 -> 2 x 8, tile aligned)
    q3 = q.reshape(BATCH, N, DIM_K)
    k3 = k.reshape(BATCH, N, DIM_K)
    v3 = v.reshape(BATCH, N, DIM_V)

    # hoist the adj broadcast out of the head loop (no CSE of broadcast_in_dim)
    adj = jnp.broadcast_to(adj_ref[...], (BATCH, N, N))

    wsum = jnp.zeros((BATCH, N, N), jnp.float32)
    head_outs = []
    for h in range(NUM_HEADS):                                  # static unroll
        qh = q3[:, :, h * DK:(h + 1) * DK]                      # (B, N, DK)
        kh = k3[:, :, h * DK:(h + 1) * DK]
        vh = v3[:, :, h * DV:(h + 1) * DV]

        # batched over the batch axis -> aligned per-batch MXU matmuls
        s = jnp.einsum('bnd,bmd->bnm', qh, kh,
                       preferred_element_type=jnp.float32)      # (B, N, N)
        s = adj * s                                             # causal_struc (mask_local=False)

        # numerically stable softmax over the last axis (exact divide on purpose)
        s = s - jnp.max(s, axis=-1, keepdims=True)
        e = jnp.exp(s)
        p = e / jnp.sum(e, axis=-1, keepdims=True)              # (B, N, N)

        wsum = wsum + p
        head_outs.append(jnp.einsum('bnm,bmd->bnd', p, vh,
                                    preferred_element_type=jnp.float32))

    # ---- single lane-dense store for att, single batched store for weight ----
    att = jnp.concatenate(head_outs, axis=-1)                   # (B, N, DIM_V)
    att_ref[...] = att.reshape(BATCH * N, DIM_V)
    weight_ref[...] = (wsum * (1.0 / NUM_HEADS)).reshape(BATCH * N, N)


def self_attention(c, u, adj, wq, bq, wk, bk, wv, bv):
    batch, n, in_dim = c.shape

    # fuse the three projections: 2 param DMAs + 1 MXU matmul instead of 6 + 3
    w_qkv = jnp.concatenate([wq, wk, wv], axis=1)               # (IN_DIM, 3*DIM_K)
    b_qkv = jnp.concatenate([bq, bk, bv], axis=1)               # (1, 3*DIM_K)

    # fold batch into the sublane axis (layout plumbing only)
    c2 = c.reshape(batch * n, in_dim)
    u2 = u.reshape(batch * n, in_dim)

    grid_spec = pltpu.PrefetchScalarGridSpec(
        num_scalar_prefetch=0,
        grid=(1,),  # one pipeline step; whole problem lives in VMEM
        # TODO(synk): for large batch on v7x, reintroduce a leading "parallel"
        # batch-chunk grid axis so both TensorCores are used.
        in_specs=[
            pl.BlockSpec((batch * n, in_dim), lambda i: (0, 0)),    # c (stacked rows)
            pl.BlockSpec((batch * n, in_dim), lambda i: (0, 0)),    # u
            pl.BlockSpec((n, n),              lambda i: (0, 0)),    # adj
            pl.BlockSpec((in_dim, 3 * DIM_K), lambda i: (0, 0)),    # fused W
            pl.BlockSpec((1, 3 * DIM_K),      lambda i: (0, 0)),    # fused b
        ],
        out_specs=[
            pl.BlockSpec((batch * n, DIM_V), lambda i: (0, 0)),     # att
            pl.BlockSpec((batch * n, n),     lambda i: (0, 0)),     # weight
        ],
    )

    att, weight = pl.pallas_call(
        self_attention_kernel,
        out_shape=(
            jax.ShapeDtypeStruct((batch * n, DIM_V), jnp.float32),
            jax.ShapeDtypeStruct((batch * n, n), jnp.float32),
        ),
        grid_spec=grid_spec,
        compiler_params=pltpu.CompilerParams(
            dimension_semantics=("arbitrary",)),
    )(c2, u2, adj, w_qkv, b_qkv)

    return att.reshape(batch, n, DIM_V), weight.reshape(batch, n, n)


if __name__ == "__main__":
    key = jax.random.PRNGKey(0)
    kc, ku, kadj, k1, k2, k3, k4, k5, k6 = jax.random.split(key, 9)

    # deterministic synthetic inputs
    c = jax.random.normal(kc, (BATCH, N, IN_DIM), jnp.float32)
    u = jax.random.normal(ku, (BATCH, N, IN_DIM), jnp.float32)
    adj = (jax.random.uniform(kadj, (N, N)) > 0.3).astype(jnp.float32)

    # deterministic synthetic Linear parameters.
    # nn.Linear applies y = x @ W.T + b; we store W already transposed -> (in, out).
    scale = 1.0 / (IN_DIM ** 0.5)
    wq = jax.random.uniform(k1, (IN_DIM, DIM_K), jnp.float32, -scale, scale)
    bq = jax.random.uniform(k2, (1, DIM_K), jnp.float32, -scale, scale)
    wk = jax.random.uniform(k3, (IN_DIM, DIM_K), jnp.float32, -scale, scale)
    bk = jax.random.uniform(k4, (1, DIM_K), jnp.float32, -scale, scale)
    wv = jax.random.uniform(k5, (IN_DIM, DIM_V), jnp.float32, -scale, scale)
    bv = jax.random.uniform(k6, (1, DIM_V), jnp.float32, -scale, scale)

    att, weight = self_attention(c, u, adj, wq, bq, wk, bk, wv, bv)
    jax.block_until_ready((att, weight))

    # lightweight pure-JAX reference check
    x = c + u
    x = x / jnp.maximum(jnp.linalg.norm(x, axis=-1, keepdims=True), EPS)
    q = (x @ wq + bq).reshape(BATCH, N, NUM_HEADS, DK).transpose(0, 2, 1, 3)
    kk = (x @ wk + bk).reshape(BATCH, N, NUM_HEADS, DK).transpose(0, 2, 1, 3)
    vv = (x @ wv + bv).reshape(BATCH, N, NUM_HEADS, DV).transpose(0, 2, 1, 3)
    dist = jnp.einsum("bhnd,bhmd->bhnm", q, kk) * NORM_FACT
    dist = adj * dist
    dist = jax.nn.softmax(dist, axis=-1)
    att_ref = jnp.einsum("bhnm,bhmd->bhnd", dist, vv).transpose(0, 2, 1, 3).reshape(BATCH, N, DIM_V)
    weight_ref = dist.mean(axis=1)

    assert jnp.allclose(att, att_ref, atol=1e-5), "att mismatch"
    assert jnp.allclose(weight, weight_ref, atol=1e-5), "weight mismatch"

    print("KERNEL_OK")
</pallas_src>

<mosaic_0001>
module attributes {stable_mosaic.version = 11 : i64} {
  func.func @self_attention_kernel(%arg0: i32, %arg1: memref<16x32xf32, #tpu.memory_space<vmem>>, %arg2: memref<16x32xf32, #tpu.memory_space<vmem>>, %arg3: memref<8x8xf32, #tpu.memory_space<vmem>>, %arg4: memref<32x96xf32, #tpu.memory_space<vmem>>, %arg5: memref<1x96xf32, #tpu.memory_space<vmem>>, %arg6: memref<16x32xf32, #tpu.memory_space<vmem>>, %arg7: memref<16x8xf32, #tpu.memory_space<vmem>>) attributes {dimension_semantics = [#tpu.dimension_semantics<arbitrary>], iteration_bounds = array<i64: 1>, scalar_prefetch = 0 : i64, scratch_operands = 0 : i64, tpu.core_type = #tpu.core_type<tc>, window_params = [{pipeline_mode = #tpu.pipeline_mode<synchronous>, transform_indices = @transform_0, window_bounds = array<i64: 16, 32>}, {pipeline_mode = #tpu.pipeline_mode<synchronous>, transform_indices = @transform_1, window_bounds = array<i64: 16, 32>}, {pipeline_mode = #tpu.pipeline_mode<synchronous>, transform_indices = @transform_2, window_bounds = array<i64: 8, 8>}, {pipeline_mode = #tpu.pipeline_mode<synchronous>, transform_indices = @transform_3, window_bounds = array<i64: 32, 96>}, {pipeline_mode = #tpu.pipeline_mode<synchronous>, transform_indices = @transform_4, window_bounds = array<i64: 1, 96>}, {pipeline_mode = #tpu.pipeline_mode<synchronous>, transform_indices = @transform_5, window_bounds = array<i64: 16, 32>}, {pipeline_mode = #tpu.pipeline_mode<synchronous>, transform_indices = @transform_6, window_bounds = array<i64: 16, 8>}]} {
    %c0 = arith.constant 0 : index
    %c0_0 = arith.constant 0 : index
    %0 = vector.load %arg1[%c0, %c0_0] : memref<16x32xf32, #tpu.memory_space<vmem>>, vector<16x32xf32>
    %c0_1 = arith.constant 0 : index
    %c0_2 = arith.constant 0 : index
    %1 = vector.load %arg2[%c0_1, %c0_2] : memref<16x32xf32, #tpu.memory_space<vmem>>, vector<16x32xf32>
    %2 = arith.addf %0, %1 : vector<16x32xf32>
    %3 = arith.mulf %2, %2 : vector<16x32xf32>
    %cst = arith.constant dense<0.000000e+00> : vector<16xf32>
    %4 = vector.multi_reduction <add>, %3, %cst [1] : vector<16x32xf32> to vector<16xf32>
    %5 = vector.shape_cast %4 : vector<16xf32> to vector<16x1xf32>
    %cst_3 = arith.constant 1.000000e-24 : f32
    %6 = vector.broadcast %cst_3 : f32 to vector<16x1xf32>
    %7 = arith.maximumf %5, %6 : vector<16x1xf32>
    %8 = math.rsqrt %7 : vector<16x1xf32>
    %9 = vector.broadcast %8 : vector<16x1xf32> to vector<16x32xf32>
    %10 = arith.mulf %2, %9 : vector<16x32xf32>
    %c0_4 = arith.constant 0 : index
    %c0_5 = arith.constant 0 : index
    %11 = vector.load %arg4[%c0_4, %c0_5] : memref<32x96xf32, #tpu.memory_space<vmem>>, vector<32x96xf32>
    %cst_6 = arith.constant dense<0.000000e+00> : vector<16x96xf32>
    %12 = tpu.matmul %10, %11, %cst_6 {dimension_numbers = #tpu.dot_dimension_numbers<[1], [0], [0], [1], [0, 0, 1, 1], [], []>} : vector<16x32xf32>, vector<32x96xf32>, vector<16x96xf32> -> vector<16x96xf32>
    %c0_7 = arith.constant 0 : index
    %c0_8 = arith.constant 0 : index
    %13 = vector.load %arg5[%c0_7, %c0_8] : memref<1x96xf32, #tpu.memory_space<vmem>>, vector<1x96xf32>
    %14 = vector.broadcast %13 : vector<1x96xf32> to vector<16x96xf32>
    %15 = arith.addf %12, %14 : vector<16x96xf32>
    %16 = vector.extract_strided_slice %15 {offsets = [0, 0], sizes = [16, 32], strides = [1, 1]} : vector<16x96xf32> to vector<16x32xf32>
    %cst_9 = arith.constant 0.176776692 : f32
    %17 = vector.broadcast %cst_9 : f32 to vector<16x32xf32>
    %18 = arith.mulf %16, %17 : vector<16x32xf32>
    %19 = vector.extract_strided_slice %15 {offsets = [0, 32], sizes = [16, 32], strides = [1, 1]} : vector<16x96xf32> to vector<16x32xf32>
    %20 = vector.extract_strided_slice %15 {offsets = [0, 64], sizes = [16, 32], strides = [1, 1]} : vector<16x96xf32> to vector<16x32xf32>
    %21 = vector.shape_cast %18 : vector<16x32xf32> to vector<2x8x32xf32>
    %22 = vector.shape_cast %19 : vector<16x32xf32> to vector<2x8x32xf32>
    %23 = vector.shape_cast %20 : vector<16x32xf32> to vector<2x8x32xf32>
    %c0_10 = arith.constant 0 : index
    %c0_11 = arith.constant 0 : index
    %24 = vector.load %arg3[%c0_10, %c0_11] : memref<8x8xf32, #tpu.memory_space<vmem>>, vector<8x8xf32>
    %25 = vector.shape_cast %24 : vector<8x8xf32> to vector<1x8x8xf32>
    %26 = vector.broadcast %25 : vector<1x8x8xf32> to vector<2x8x8xf32>
    %cst_12 = arith.constant 0.000000e+00 : f32
    %27 = vector.broadcast %cst_12 : f32 to vector<2x8x8xf32>
    %28 = vector.extract_strided_slice %21 {offsets = [0, 0, 0], sizes = [2, 8, 8], strides = [1, 1, 1]} : vector<2x8x32xf32> to vector<2x8x8xf32>
    %29 = vector.extract_strided_slice %22 {offsets = [0, 0, 0], sizes = [2, 8, 8], strides = [1, 1, 1]} : vector<2x8x32xf32> to vector<2x8x8xf32>
    %30 = vector.extract_strided_slice %23 {offsets = [0, 0, 0], sizes = [2, 8, 8], strides = [1, 1, 1]} : vector<2x8x32xf32> to vector<2x8x8xf32>
    "tpu.trace_start"() <{level = 10 : i32, message = "bnd,bmd->bnm"}> : () -> ()
    %cst_13 = arith.constant dense<0.000000e+00> : vector<2x8x8xf32>
    %31 = tpu.matmul %28, %29, %cst_13 {dimension_numbers = #tpu.dot_dimension_numbers<[2], [2], [1], [1], [0, 0, 0, 1, 1, 1], [0], [0]>} : vector<2x8x8xf32>, vector<2x8x8xf32>, vector<2x8x8xf32> -> vector<2x8x8xf32>
    "tpu.trace_stop"() : () -> ()
    %32 = arith.mulf %26, %31 : vector<2x8x8xf32>
    %cst_14 = arith.constant dense<0xFF800000> : vector<2x8xf32>
    %33 = vector.multi_reduction <maximumf>, %32, %cst_14 [2] : vector<2x8x8xf32> to vector<2x8xf32>
    %34 = vector.shape_cast %33 : vector<2x8xf32> to vector<2x8x1xf32>
    %35 = vector.broadcast %34 : vector<2x8x1xf32> to vector<2x8x8xf32>
    %36 = arith.subf %32, %35 : vector<2x8x8xf32>
    %37 = math.exp %36 : vector<2x8x8xf32>
    %cst_15 = arith.constant dense<0.000000e+00> : vector<2x8xf32>
    %38 = vector.multi_reduction <add>, %37, %cst_15 [2] : vector<2x8x8xf32> to vector<2x8xf32>
    %39 = vector.shape_cast %38 : vector<2x8xf32> to vector<2x8x1xf32>
    %40 = vector.broadcast %39 : vector<2x8x1xf32> to vector<2x8x8xf32>
    %41 = arith.divf %37, %40 : vector<2x8x8xf32>
    %42 = arith.addf %27, %41 : vector<2x8x8xf32>
    "tpu.trace_start"() <{level = 10 : i32, message = "bnm,bmd->bnd"}> : () -> ()
    %cst_16 = arith.constant dense<0.000000e+00> : vector<2x8x8xf32>
    %43 = tpu.matmul %41, %30, %cst_16 {dimension_numbers = #tpu.dot_dimension_numbers<[2], [1], [1], [2], [0, 0, 0, 1, 1, 2], [0], [0]>} : vector<2x8x8xf32>, vector<2x8x8xf32>, vector<2x8x8xf32> -> vector<2x8x8xf32>
    "tpu.trace_stop"() : () -> ()
    %44 = vector.extract_strided_slice %21 {offsets = [0, 0, 8], sizes = [2, 8, 8], strides = [1, 1, 1]} : vector<2x8x32xf32> to vector<2x8x8xf32>
    %45 = vector.extract_strided_slice %22 {offsets = [0, 0, 8], sizes = [2, 8, 8], strides = [1, 1, 1]} : vector<2x8x32xf32> to vector<2x8x8xf32>
    %46 = vector.extract_strided_slice %23 {offsets = [0, 0, 8], sizes = [2, 8, 8], strides = [1, 1, 1]} : vector<2x8x32xf32> to vector<2x8x8xf32>
    "tpu.trace_start"() <{level = 10 : i32, message = "bnd,bmd->bnm"}> : () -> ()
    %cst_17 = arith.constant dense<0.000000e+00> : vector<2x8x8xf32>
    %47 = tpu.matmul %44, %45, %cst_17 {dimension_numbers = #tpu.dot_dimension_numbers<[2], [2], [1], [1], [0, 0, 0, 1, 1, 1], [0], [0]>} : vector<2x8x8xf32>, vector<2x8x8xf32>, vector<2x8x8xf32> -> vector<2x8x8xf32>
    "tpu.trace_stop"() : () -> ()
    %48 = arith.mulf %26, %47 : vector<2x8x8xf32>
    %cst_18 = arith.constant dense<0xFF800000> : vector<2x8xf32>
    %49 = vector.multi_reduction <maximumf>, %48, %cst_18 [2] : vector<2x8x8xf32> to vector<2x8xf32>
    %50 = vector.shape_cast %49 : vector<2x8xf32> to vector<2x8x1xf32>
    %51 = vector.broadcast %50 : vector<2x8x1xf32> to vector<2x8x8xf32>
    %52 = arith.subf %48, %51 : vector<2x8x8xf32>
    %53 = math.exp %52 : vector<2x8x8xf32>
    %cst_19 = arith.constant dense<0.000000e+00> : vector<2x8xf32>
    %54 = vector.multi_reduction <add>, %53, %cst_19 [2] : vector<2x8x8xf32> to vector<2x8xf32>
    %55 = vector.shape_cast %54 : vector<2x8xf32> to vector<2x8x1xf32>
    %56 = vector.broadcast %55 : vector<2x8x1xf32> to vector<2x8x8xf32>
    %57 = arith.divf %53, %56 : vector<2x8x8xf32>
    %58 = arith.addf %42, %57 : vector<2x8x8xf32>
    "tpu.trace_start"() <{level = 10 : i32, message = "bnm,bmd->bnd"}> : () -> ()
    %cst_20 = arith.constant dense<0.000000e+00> : vector<2x8x8xf32>
    %59 = tpu.matmul %57, %46, %cst_20 {dimension_numbers = #tpu.dot_dimension_numbers<[2], [1], [1], [2], [0, 0, 0, 1, 1, 2], [0], [0]>} : vector<2x8x8xf32>, vector<2x8x8xf32>, vector<2x8x8xf32> -> vector<2x8x8xf32>
    "tpu.trace_stop"() : () -> ()
    %60 = vector.extract_strided_slice %21 {offsets = [0, 0, 16], sizes = [2, 8, 8], strides = [1, 1, 1]} : vector<2x8x32xf32> to vector<2x8x8xf32>
    %61 = vector.extract_strided_slice %22 {offsets = [0, 0, 16], sizes = [2, 8, 8], strides = [1, 1, 1]} : vector<2x8x32xf32> to vector<2x8x8xf32>
    %62 = vector.extract_strided_slice %23 {offsets = [0, 0, 16], sizes = [2, 8, 8], strides = [1, 1, 1]} : vector<2x8x32xf32> to vector<2x8x8xf32>
    "tpu.trace_start"() <{level = 10 : i32, message = "bnd,bmd->bnm"}> : () -> ()
    %cst_21 = arith.constant dense<0.000000e+00> : vector<2x8x8xf32>
    %63 = tpu.matmul %60, %61, %cst_21 {dimension_numbers = #tpu.dot_dimension_numbers<[2], [2], [1], [1], [0, 0, 0, 1, 1, 1], [0], [0]>} : vector<2x8x8xf32>, vector<2x8x8xf32>, vector<2x8x8xf32> -> vector<2x8x8xf32>
    "tpu.trace_stop"() : () -> ()
    %64 = arith.mulf %26, %63 : vector<2x8x8xf32>
    %cst_22 = arith.constant dense<0xFF800000> : vector<2x8xf32>
    %65 = vector.multi_reduction <maximumf>, %64, %cst_22 [2] : vector<2x8x8xf32> to vector<2x8xf32>
    %66 = vector.shape_cast %65 : vector<2x8xf32> to vector<2x8x1xf32>
    %67 = vector.broadcast %66 : vector<2x8x1xf32> to vector<2x8x8xf32>
    %68 = arith.subf %64, %67 : vector<2x8x8xf32>
    %69 = math.exp %68 : vector<2x8x8xf32>
    %cst_23 = arith.constant dense<0.000000e+00> : vector<2x8xf32>
    %70 = vector.multi_reduction <add>, %69, %cst_23 [2] : vector<2x8x8xf32> to vector<2x8xf32>
    %71 = vector.shape_cast %70 : vector<2x8xf32> to vector<2x8x1xf32>
    %72 = vector.broadcast %71 : vector<2x8x1xf32> to vector<2x8x8xf32>
    %73 = arith.divf %69, %72 : vector<2x8x8xf32>
    %74 = arith.addf %58, %73 : vector<2x8x8xf32>
    "tpu.trace_start"() <{level = 10 : i32, message = "bnm,bmd->bnd"}> : () -> ()
    %cst_24 = arith.constant dense<0.000000e+00> : vector<2x8x8xf32>
    %75 = tpu.matmul %73, %62, %cst_24 {dimension_numbers = #tpu.dot_dimension_numbers<[2], [1], [1], [2], [0, 0, 0, 1, 1, 2], [0], [0]>} : vector<2x8x8xf32>, vector<2x8x8xf32>, vector<2x8x8xf32> -> vector<2x8x8xf32>
    "tpu.trace_stop"() : () -> ()
    %76 = vector.extract_strided_slice %21 {offsets = [0, 0, 24], sizes = [2, 8, 8], strides = [1, 1, 1]} : vector<2x8x32xf32> to vector<2x8x8xf32>
    %77 = vector.extract_strided_slice %22 {offsets = [0, 0, 24], sizes = [2, 8, 8], strides = [1, 1, 1]} : vector<2x8x32xf32> to vector<2x8x8xf32>
    %78 = vector.extract_strided_slice %23 {offsets = [0, 0, 24], sizes = [2, 8, 8], strides = [1, 1, 1]} : vector<2x8x32xf32> to vector<2x8x8xf32>
    "tpu.trace_start"() <{level = 10 : i32, message = "bnd,bmd->bnm"}> : () -> ()
    %cst_25 = arith.constant dense<0.000000e+00> : vector<2x8x8xf32>
    %79 = tpu.matmul %76, %77, %cst_25 {dimension_numbers = #tpu.dot_dimension_numbers<[2], [2], [1], [1], [0, 0, 0, 1, 1, 1], [0], [0]>} : vector<2x8x8xf32>, vector<2x8x8xf32>, vector<2x8x8xf32> -> vector<2x8x8xf32>
    "tpu.trace_stop"() : () -> ()
    %80 = arith.mulf %26, %79 : vector<2x8x8xf32>
    %cst_26 = arith.constant dense<0xFF800000> : vector<2x8xf32>
    %81 = vector.multi_reduction <maximumf>, %80, %cst_26 [2] : vector<2x8x8xf32> to vector<2x8xf32>
    %82 = vector.shape_cast %81 : vector<2x8xf32> to vector<2x8x1xf32>
    %83 = vector.broadcast %82 : vector<2x8x1xf32> to vector<2x8x8xf32>
    %84 = arith.subf %80, %83 : vector<2x8x8xf32>
    %85 = math.exp %84 : vector<2x8x8xf32>
    %cst_27 = arith.constant dense<0.000000e+00> : vector<2x8xf32>
    %86 = vector.multi_reduction <add>, %85, %cst_27 [2] : vector<2x8x8xf32> to vector<2x8xf32>
    %87 = vector.shape_cast %86 : vector<2x8xf32> to vector<2x8x1xf32>
    %88 = vector.broadcast %87 : vector<2x8x1xf32> to vector<2x8x8xf32>
    %89 = arith.divf %85, %88 : vector<2x8x8xf32>
    %90 = arith.addf %74, %89 : vector<2x8x8xf32>
    "tpu.trace_start"() <{level = 10 : i32, message = "bnm,bmd->bnd"}> : () -> ()
    %cst_28 = arith.constant dense<0.000000e+00> : vector<2x8x8xf32>
    %91 = tpu.matmul %89, %78, %cst_28 {dimension_numbers = #tpu.dot_dimension_numbers<[2], [1], [1], [2], [0, 0, 0, 1, 1, 2], [0], [0]>} : vector<2x8x8xf32>, vector<2x8x8xf32>, vector<2x8x8xf32> -> vector<2x8x8xf32>
    "tpu.trace_stop"() : () -> ()
    %92 = tpu.concatenate %43, %59, %75, %91 in 2 : vector<2x8x8xf32>, vector<2x8x8xf32>, vector<2x8x8xf32>, vector<2x8x8xf32> -> vector<2x8x32xf32>
    %93 = vector.shape_cast %92 : vector<2x8x32xf32> to vector<16x32xf32>
    %c0_29 = arith.constant 0 : index
    %c0_30 = arith.constant 0 : index
    %94 = vector.load %arg6[%c0_29, %c0_30] : memref<16x32xf32, #tpu.memory_space<vmem>>, vector<16x32xf32>
    tpu.vector_store %arg6[%c0_29, %c0_30], %93 {strides = array<i32>} : memref<16x32xf32, #tpu.memory_space<vmem>>, vector<16x32xf32>,
    %cst_31 = arith.constant 2.500000e-01 : f32
    %95 = vector.broadcast %cst_31 : f32 to vector<2x8x8xf32>
    %96 = arith.mulf %90, %95 : vector<2x8x8xf32>
    %97 = vector.shape_cast %96 : vector<2x8x8xf32> to vector<16x8xf32>
    %c0_32 = arith.constant 0 : index
    %c0_33 = arith.constant 0 : index
    %98 = vector.load %arg7[%c0_32, %c0_33] : memref<16x8xf32, #tpu.memory_space<vmem>>, vector<16x8xf32>
    tpu.vector_store %arg7[%c0_32, %c0_33], %97 {strides = array<i32>} : memref<16x8xf32, #tpu.memory_space<vmem>>, vector<16x8xf32>,
    return
  }
  func.func @transform_0(%arg0: i32) -> (i32, i32) {
    %c0_i32 = arith.constant 0 : i32
    %c0_i32_0 = arith.constant 0 : i32
    %c0_i32_1 = arith.constant 0 : i32
    return %c0_i32, %c0_i32_0 : i32, i32
  }
  func.func @transform_1(%arg0: i32) -> (i32, i32) {
    %c0_i32 = arith.constant 0 : i32
    %c0_i32_0 = arith.constant 0 : i32
    %c0_i32_1 = arith.constant 0 : i32
    return %c0_i32, %c0_i32_0 : i32, i32
  }
  func.func @transform_2(%arg0: i32) -> (i32, i32) {
    %c0_i32 = arith.constant 0 : i32
    %c0_i32_0 = arith.constant 0 : i32
    %c0_i32_1 = arith.constant 0 : i32
    return %c0_i32, %c0_i32_0 : i32, i32
  }
  func.func @transform_3(%arg0: i32) -> (i32, i32) {
    %c0_i32 = arith.constant 0 : i32
    %c0_i32_0 = arith.constant 0 : i32
    %c0_i32_1 = arith.constant 0 : i32
    return %c0_i32, %c0_i32_0 : i32, i32
  }
  func.func @transform_4(%arg0: i32) -> (i32, i32) {
    %c0_i32 = arith.constant 0 : i32
    %c0_i32_0 = arith.constant 0 : i32
    %c0_i32_1 = arith.constant 0 : i32
    return %c0_i32, %c0_i32_0 : i32, i32
  }
  func.func @transform_5(%arg0: i32) -> (i32, i32) {
    %c0_i32 = arith.constant 0 : i32
    %c0_i32_0 = arith.constant 0 : i32
    %c0_i32_1 = arith.constant 0 : i32
    return %c0_i32, %c0_i32_0 : i32, i32
  }
  func.func @transform_6(%arg0: i32) -> (i32, i32) {
    %c0_i32 = arith.constant 0 : i32
    %c0_i32_0 = arith.constant 0 : i32
    %c0_i32_1 = arith.constant 0 : i32
    return %c0_i32, %c0_i32_0 : i32, i32
  }
}

</mosaic_0001>

<llo_original>
// kernel: tpu_custom_call.1
$region0: #{tpu_custom_call.1}
  #allocation0 [shape = 'u32[]', space=smem, size = 0x4, offset = 0x4, fixed_abs, tag = 'smem constant byte address 0x4 - core index']
  #allocation1 [shape = 'u32[144,128]{1,0:T(1,128)}', space=vmem, size = 0x12000, scoped, tag = 'internal scratch']
  %s0 = inlined_call_operand.hbm [shape: f32[16,32], index: 0, kind: input, shape index: {}]
  %s1 = inlined_call_operand.hbm [shape: f32[16,32], index: 1, kind: input, shape index: {}]
  %s2 = inlined_call_operand.hbm [shape: f32[8,8], index: 2, kind: input, shape index: {}]
  %s3 = inlined_call_operand.hbm [shape: f32[32,96], index: 3, kind: input, shape index: {}]
  %s4 = inlined_call_operand.vmem [shape: f32[1,96], index: 4, kind: input, shape index: {}]
  %s5 = inlined_call_operand.hbm [shape: f32[16,32], index: 5, kind: output, shape index: {0}]
  %s6 = inlined_call_operand.vmem [shape: f32[16,8], index: 6, kind: output, shape index: {1}]
  %7 = xla_tuple %s5, %s6
  %s8 = sld [smem:[#allocation0]]
  $region54: #{tpu_custom_call.1} parent=0
    _
  %s10 = ssub.s32 1, %s8
  %s11 = scalar_select 0, %s10, %s8
  $region1: #{tpu_custom_call.1} parent=0
    #allocation2 [shape = 'u8[8192]{0}', space=vmem, size = 0x2000, scoped, tag = 'input window, operand 0, single buffered']
    #allocation3 [shape = 's32[1]{0}', space=sflag, size = 0x4, scoped, tag = 'scoped memory for tpu_custom_call.1']
    #allocation4 [shape = 's32[1]{0}', space=sflag, size = 0x4, scoped, tag = 'scoped memory for tpu_custom_call.1']
    #allocation5 [shape = 'u8[8192]{0}', space=vmem, size = 0x2000, scoped, tag = 'input window, operand 1, single buffered']
    #allocation6 [shape = 's32[1]{0}', space=sflag, size = 0x4, scoped, tag = 'scoped memory for tpu_custom_call.1']
    #allocation7 [shape = 'u8[4096]{0}', space=vmem, size = 0x1000, scoped, tag = 'input window, operand 2, single buffered']
    #allocation8 [shape = 'u8[16384]{0}', space=vmem, size = 0x4000, scoped, tag = 'input window, operand 3, single buffered']
    #allocation9 [shape = 's32[1]{0}', space=sflag, size = 0x4, scoped, tag = 'scoped memory for tpu_custom_call.1']
    #allocation10 [shape = 'u8[8192]{0}', space=vmem, size = 0x2000, scoped, tag = 'output window, operand 0, single buffered']
    %12 = vsyncpa [#allocation3], 0
    %13 = vsyncpa [#allocation6], 0
    %14 = vsyncpa [#allocation9], 0
    %15 = vsyncpa [#allocation4], 0
    // Predicated region
    $region2: #{tpu_custom_call.1} parent=1 // pred_check
      _
    $region3: #{tpu_custom_call.1} parent=1 // pred_check_branch
      %17 = sbr.rel (0) target = $region5
    $region4: #{tpu_custom_call.1} parent=1 // pred_region
      %s19 = ssub.s32 256, 256
      %20 = vsyncadd [#allocation3], %s19
      %s21 = sshll.u32 [#allocation2], 4
      %s22 = int_to_ptr.vmem [resolvable:$true] %s21
      %27 = dma.hbm_to_vmem [thread:$0]  %s0, 256, %s22, [#allocation3], 128, 128, 8
    $region5: #{tpu_custom_call.1} parent=1 // pred_fallthru
      _
    // Predicated region
    $region6: #{tpu_custom_call.1} parent=1 // pred_check
      _
    $region7: #{tpu_custom_call.1} parent=1 // pred_check_branch
      %29 = sbr.rel (0) target = $region9
    $region8: #{tpu_custom_call.1} parent=1 // pred_region
      %s31 = ssub.s32 256, 256
      %32 = vsyncadd [#allocation6], %s31
      %s33 = sshll.u32 [#allocation5], 4
      %s34 = int_to_ptr.vmem [resolvable:$true] %s33
      %39 = dma.hbm_to_vmem [thread:$0]  %s1, 256, %s34, [#allocation6], 128, 128, 8
    $region9: #{tpu_custom_call.1} parent=1 // pred_fallthru
      _
    // Predicated region
    $region10: #{tpu_custom_call.1} parent=1 // pred_check
      _
    $region11: #{tpu_custom_call.1} parent=1 // pred_check_branch
      %41 = sbr.rel (0) target = $region13
    $region12: #{tpu_custom_call.1} parent=1 // pred_region
      %s43 = ssub.s32 128, 128
      %44 = vsyncadd [#allocation6], %s43
      %s46 = sshll.u32 [#allocation7], 4
      %s47 = int_to_ptr.vmem [resolvable:$true] %s46
      %49 = dma.hbm_to_vmem [thread:$0]  %s2, 128, %s47, [#allocation6]
    $region13: #{tpu_custom_call.1} parent=1 // pred_fallthru
      _
    // Predicated region
    $region14: #{tpu_custom_call.1} parent=1 // pred_check
      _
    $region15: #{tpu_custom_call.1} parent=1 // pred_check_branch
      %51 = sbr.rel (0) target = $region17
    $region16: #{tpu_custom_call.1} parent=1 // pred_region
      %s53 = ssub.s32 512, 512
      %54 = vsyncadd [#allocation9], %s53
      %s55 = sshll.u32 [#allocation8], 4
      %s56 = int_to_ptr.vmem [resolvable:$true] %s55
      %61 = dma.hbm_to_vmem [thread:$0]  %s3, 512, %s56, [#allocation9], 128, 128, 8
    $region17: #{tpu_custom_call.1} parent=1 // pred_fallthru
      _
    // Predicated region
    $region18: #{tpu_custom_call.1} parent=1 // pred_check
      _
    $region19: #{tpu_custom_call.1} parent=1 // pred_check_branch
      %63 = sbr.rel (0) target = $region21
    $region20: #{tpu_custom_call.1} parent=1 // pred_region
      _
    $region21: #{tpu_custom_call.1} parent=1 // pred_fallthru
      _
    // Predicated region
    $region22: #{tpu_custom_call.1} parent=1 // pred_check
      _
    $region23: #{tpu_custom_call.1} parent=1 // pred_check_branch
      %65 = sbr.rel (0) target = $region25
    $region24: #{tpu_custom_call.1} parent=1 // pred_region
      %66 = dma.done [#allocation3], 256
    $region25: #{tpu_custom_call.1} parent=1 // pred_fallthru
      _
    // Predicated region
    $region26: #{tpu_custom_call.1} parent=1 // pred_check
      _
    $region27: #{tpu_custom_call.1} parent=1 // pred_check_branch
      %68 = sbr.rel (0) target = $region29
    $region28: #{tpu_custom_call.1} parent=1 // pred_region
      %69 = dma.done [#allocation6], 256
    $region29: #{tpu_custom_call.1} parent=1 // pred_fallthru
      _
    // Predicated region
    $region30: #{tpu_custom_call.1} parent=1 // pred_check
      _
    $region31: #{tpu_custom_call.1} parent=1 // pred_check_branch
      %71 = sbr.rel (0) target = $region33
    $region32: #{tpu_custom_call.1} parent=1 // pred_region
      %72 = dma.done [#allocation6], 128
    $region33: #{tpu_custom_call.1} parent=1 // pred_fallthru
      _
    // Predicated region
    $region34: #{tpu_custom_call.1} parent=1 // pred_check
      _
    $region35: #{tpu_custom_call.1} parent=1 // pred_check_branch
      %74 = sbr.rel (0) target = $region37
    $region36: #{tpu_custom_call.1} parent=1 // pred_region
      %75 = dma.done [#allocation9], 512
    $region37: #{tpu_custom_call.1} parent=1 // pred_fallthru
      _
    %v76 = vld [vmem:[#allocation2] sm:$0xff]
    %v77 = vld [vmem:[#allocation2 + $0x8] sm:$0xff]
    %v78 = vld [vmem:[#allocation5] sm:$0xff]
    %v79 = vld [vmem:[#allocation5 + $0x8] sm:$0xff]
    %v80 = vadd.f32 %v76, %v78
    %v81 = vadd.f32 %v77, %v79
    %v82 = vmul.f32 %v80, %v80
    %v83 = vmul.f32 %v81, %v81
    %vm84 = vcmask 261120
    %v85 = vsel %vm84, %v82, 0.0
    %86 = vadd.xlane.f32.xlu0 %v85
    %v87 = vpop.xlane.xlu0 %86
    %v88 = vsel %vm84, %v83, 0.0
    %89 = vadd.xlane.f32.xlu0 %v88
    %v90 = vpop.xlane.xlu0 %89
    %v91 = vmax.f32 %v87, 1e-24
    %v92 = vmax.f32 %v90, 1e-24
    %v93 = vrsqrt.pop %v91
    %v94 = vrsqrt.pop %v92
    %v95 = vmul.f32 %v80, %v93
    %v96 = vmul.f32 %v81, %v94
    %v97 = vld [vmem:[#allocation8] sm:$0xff]
    %v98 = vld [vmem:[#allocation8 + $0x8] sm:$0xff]
    %v99 = vld [vmem:[#allocation8 + $0x10] sm:$0xff]
    %v100 = vld [vmem:[#allocation8 + $0x18] sm:$0xff]
    %v101 = vld [vmem:[%s4] sm:$0x1]
    %v103 = vlaneseq
    %v104 = vshrl.u32 %v103, 7
    %v105 = vsub.s32 0, %v104
    %v106 = vrot.slane %v101, %v105
    %v109 = vsel %vm84, %v95, 0
    %v112 = vsel %vm84, %v96, 0
    %114 = vmatprep.subr.mxu0 0.0
    %115 = vmatpush1.msra.mxu0 %v97
    %116 = vmatprep.subr.mxu0 0.0
    %117 = vmatpush1.msra.mxu0 %v98
    %118 = vmatprep.subr.mxu0 0.0
    %119 = vmatpush1.msra.mxu0 %v99
    %120 = vmatprep.subr.mxu0 0.0
    %121 = vmatpush1.msra.mxu0 %v100
    %122 = vmatprep.subr.mxu0 0.0
    %123 = vmatpush1.msra.mxu0 0.0
    %124 = vmatprep.subr.mxu0 0.0
    %125 = vmatpush1.msra.mxu0 0.0
    %126 = vmatprep.subr.mxu0 0.0
    %127 = vmatpush1.msra.mxu0 0.0
    %128 = vmatprep.subr.mxu0 0.0
    %129 = vmatpush1.msra.mxu0 0.0
    %130 = vmatprep.subr.mxu0 0.0
    %131 = vmatpush1.msra.mxu0 0.0
    %132 = vmatprep.subr.mxu0 0.0
    %133 = vmatpush1.msra.mxu0 0.0
    %134 = vmatprep.subr.mxu0 0.0
    %135 = vmatpush1.msra.mxu0 0.0
    %136 = vmatprep.subr.mxu0 0.0
    %137 = vmatpush1.msra.mxu0 0.0
    %138 = vmatprep.subr.mxu0 0.0
    %139 = vmatpush1.msra.mxu0 0.0
    %140 = vmatprep.subr.mxu0 0.0
    %141 = vmatpush1.msra.mxu0 0.0
    %142 = vmatprep.subr.mxu0 0.0
    %143 = vmatpush1.msra.mxu0 0.0
    %144 = vmatprep.subr.mxu0 0.0
    %145 = vmatpush1.msra.mxu0 0.0
    %146 = vmatprep.subr.mxu0 0.0
    %147 = vmatpush1.msra.mxu0 0.0
    %148 = vmatprep.subr.mxu0 0.0
    %149 = vmatpush1.msra.mxu0 0.0
    %150 = vmatprep.subr.mxu0 0.0
    %151 = vmatpush1.msra.mxu0 0.0
    %152 = vmatprep.subr.mxu0 0.0
    %153 = vmatpush1.msra.mxu0 0.0
    %154 = vmatprep.subr.mxu0 0.0
    %155 = vmatpush1.msra.mxu0 0.0
    %156 = vmatprep.subr.mxu0 0.0
    %157 = vmatpush1.msra.mxu0 0.0
    %158 = vmatprep.subr.mxu0 0.0
    %159 = vmatpush1.msra.mxu0 0.0
    %160 = vmatprep.subr.mxu0 0.0
    %161 = vmatpush1.msra.mxu0 0.0
    %162 = vmatprep.subr.mxu0 0.0
    %163 = vmatpush1.msra.mxu0 0.0
    %164 = vmatprep.subr.mxu0 0.0
    %165 = vmatpush1.msra.mxu0 0.0
    %166 = vmatprep.subr.mxu0 0.0
    %167 = vmatpush1.msra.mxu0 0.0
    %168 = vmatprep.subr.mxu0 0.0
    %169 = vmatpush1.msra.mxu0 0.0
    %170 = vmatprep.subr.mxu0 0.0
    %171 = vmatpush1.msra.mxu0 0.0
    %172 = vmatprep.subr.mxu0 0.0
    %173 = vmatpush1.msra.mxu0 0.0
    %174 = vmatprep.subr.mxu0 0.0
    %175 = vmatpush1.msra.mxu0 0.0
    %176 = vmatprep.subr.mxu0 0.0
    %177 = vmatpush1.msra.mxu0 0.0
    %178 = vmatprep.mubr.f32.mxu0 0.0
    %179 = vmatmul.mubr.f32.gmra.mrb[0].mxu0 %v109
    %v180 = vpop.f32.mrb[0].mxu0
    %v181 = vadd.f32 %v106, %v180
    %v182 = vpop.f32.mrb[0].mxu0
    %183 = vmatprep.mubr.f32.mxu0 0.0
    %184 = vmatmul.mubr.f32.gmra.mrb[0].mxu0 %v112
    %v185 = vpop.f32.mrb[0].mxu0
    %v186 = vadd.f32 %v106, %v185
    %v187 = vpop.f32.mrb[0].mxu0
    %188 = vdwg.mxu0
    %v189 = vmul.f32 %v181, 0.17677669
    %v190 = vmul.f32 %v186, 0.17677669
    %v191 = vld [vmem:[#allocation7] sm:$0xff]
    %193 = vrot.lane.b32.xlu0 %v181, 96
    %v194 = vpop.permute.xlu0 %193
    %vm195 = vcmask 64512
    %v197 = vsel %vm195, %v189, 0
    %v199 = vsel %vm195, %v194, 0
    %201 = vmatprep.subr.mxu0 0.0
    %202 = vmatpush1.xpose.msra.mxu0 %v199
    %203 = vmatprep.subr.mxu0 0.0
    %204 = vmatpush1.xpose.msra.mxu0 0.0
    %205 = vmatprep.subr.mxu0 0.0
    %206 = vmatpush1.xpose.msra.mxu0 0.0
    %207 = vmatprep.subr.mxu0 0.0
    %208 = vmatpush1.xpose.msra.mxu0 0.0
    %209 = vmatprep.subr.mxu0 0.0
    %210 = vmatpush1.xpose.msra.mxu0 0.0
    %211 = vmatprep.subr.mxu0 0.0
    %212 = vmatpush1.xpose.msra.mxu0 0.0
    %213 = vmatprep.subr.mxu0 0.0
    %214 = vmatpush1.xpose.msra.mxu0 0.0
    %215 = vmatprep.subr.mxu0 0.0
    %216 = vmatpush1.xpose.msra.mxu0 0.0
    %217 = vmatprep.subr.mxu0 0.0
    %218 = vmatpush1.xpose.msra.mxu0 0.0
    %219 = vmatprep.subr.mxu0 0.0
    %220 = vmatpush1.xpose.msra.mxu0 0.0
    %221 = vmatprep.subr.mxu0 0.0
    %222 = vmatpush1.xpose.msra.mxu0 0.0
    %223 = vmatprep.subr.mxu0 0.0
    %224 = vmatpush1.xpose.msra.mxu0 0.0
    %225 = vmatprep.subr.mxu0 0.0
    %226 = vmatpush1.xpose.msra.mxu0 0.0
    %227 = vmatprep.subr.mxu0 0.0
    %228 = vmatpush1.xpose.msra.mxu0 0.0
    %229 = vmatprep.subr.mxu0 0.0
    %230 = vmatpush1.xpose.msra.mxu0 0.0
    %231 = vmatprep.subr.mxu0 0.0
    %232 = vmatpush1.xpose.msra.mxu0 0.0
    %233 = vmatprep.subr.mxu0 0.0
    %234 = vmatpush1.xpose.msra.mxu0 0.0
    %235 = vmatprep.subr.mxu0 0.0
    %236 = vmatpush1.xpose.msra.mxu0 0.0
    %237 = vmatprep.subr.mxu0 0.0
    %238 = vmatpush1.xpose.msra.mxu0 0.0
    %239 = vmatprep.subr.mxu0 0.0
    %240 = vmatpush1.xpose.msra.mxu0 0.0
    %241 = vmatprep.subr.mxu0 0.0
    %242 = vmatpush1.xpose.msra.mxu0 0.0
    %243 = vmatprep.subr.mxu0 0.0
    %244 = vmatpush1.xpose.msra.mxu0 0.0
    %245 = vmatprep.subr.mxu0 0.0
    %246 = vmatpush1.xpose.msra.mxu0 0.0
    %247 = vmatprep.subr.mxu0 0.0
    %248 = vmatpush1.xpose.msra.mxu0 0.0
    %249 = vmatprep.subr.mxu0 0.0
    %250 = vmatpush1.xpose.msra.mxu0 0.0
    %251 = vmatprep.subr.mxu0 0.0
    %252 = vmatpush1.xpose.msra.mxu0 0.0
    %253 = vmatprep.subr.mxu0 0.0
    %254 = vmatpush1.xpose.msra.mxu0 0.0
    %255 = vmatprep.subr.mxu0 0.0
    %256 = vmatpush1.xpose.msra.mxu0 0.0
    %257 = vmatprep.subr.mxu0 0.0
    %258 = vmatpush1.xpose.msra.mxu0 0.0
    %259 = vmatprep.subr.mxu0 0.0
    %260 = vmatpush1.xpose.msra.mxu0 0.0
    %261 = vmatprep.subr.mxu0 0.0
    %262 = vmatpush1.xpose.msra.mxu0 0.0
    %263 = vmatprep.subr.mxu0 0.0
    %264 = vmatpush1.xpose.msra.mxu0 0.0
    %265 = vmatprep.mubr.f32.mxu0 0.0
    %266 = vmatmul.mubr.f32.gmra.mrb[0].mxu0 %v197
    %v267 = vpop.f32.mrb[0].mxu0
    %v268 = vadd.f32 0.0, %v267
    %v269 = vpop.f32.mrb[0].mxu0
    %270 = vdwg.mxu0
    %272 = vrot.lane.b32.xlu0 %v186, 96
    %v273 = vpop.permute.xlu0 %272
    %v275 = vsel %vm195, %v190, 0
    %v277 = vsel %vm195, %v273, 0
    %279 = vmatprep.subr.mxu0 0.0
    %280 = vmatpush1.xpose.msra.mxu0 %v277
    %281 = vmatprep.subr.mxu0 0.0
    %282 = vmatpush1.xpose.msra.mxu0 0.0
    %283 = vmatprep.subr.mxu0 0.0
    %284 = vmatpush1.xpose.msra.mxu0 0.0
    %285 = vmatprep.subr.mxu0 0.0
    %286 = vmatpush1.xpose.msra.mxu0 0.0
    %287 = vmatprep.subr.mxu0 0.0
    %288 = vmatpush1.xpose.msra.mxu0 0.0
    %289 = vmatprep.subr.mxu0 0.0
    %290 = vmatpush1.xpose.msra.mxu0 0.0
    %291 = vmatprep.subr.mxu0 0.0
    %292 = vmatpush1.xpose.msra.mxu0 0.0
    %293 = vmatprep.subr.mxu0 0.0
    %294 = vmatpush1.xpose.msra.mxu0 0.0
    %295 = vmatprep.subr.mxu0 0.0
    %296 = vmatpush1.xpose.msra.mxu0 0.0
    %297 = vmatprep.subr.mxu0 0.0
    %298 = vmatpush1.xpose.msra.mxu0 0.0
    %299 = vmatprep.subr.mxu0 0.0
    %300 = vmatpush1.xpose.msra.mxu0 0.0
    %301 = vmatprep.subr.mxu0 0.0
    %302 = vmatpush1.xpose.msra.mxu0 0.0
    %303 = vmatprep.subr.mxu0 0.0
    %304 = vmatpush1.xpose.msra.mxu0 0.0
    %305 = vmatprep.subr.mxu0 0.0
    %306 = vmatpush1.xpose.msra.mxu0 0.0
    %307 = vmatprep.subr.mxu0 0.0
    %308 = vmatpush1.xpose.msra.mxu0 0.0
    %309 = vmatprep.subr.mxu0 0.0
    %310 = vmatpush1.xpose.msra.mxu0 0.0
    %311 = vmatprep.subr.mxu0 0.0
    %312 = vmatpush1.xpose.msra.mxu0 0.0
    %313 = vmatprep.subr.mxu0 0.0
    %314 = vmatpush1.xpose.msra.mxu0 0.0
    %315 = vmatprep.subr.mxu0 0.0
    %316 = vmatpush1.xpose.msra.mxu0 0.0
    %317 = vmatprep.subr.mxu0 0.0
    %318 = vmatpush1.xpose.msra.mxu0 0.0
    %319 = vmatprep.subr.mxu0 0.0
    %320 = vmatpush1.xpose.msra.mxu0 0.0
    %321 = vmatprep.subr.mxu0 0.0
    %322 = vmatpush1.xpose.msra.mxu0 0.0
    %323 = vmatprep.subr.mxu0 0.0
    %324 = vmatpush1.xpose.msra.mxu0 0.0
    %325 = vmatprep.subr.mxu0 0.0
    %326 = vmatpush1.xpose.msra.mxu0 0.0
    %327 = vmatprep.subr.mxu0 0.0
    %328 = vmatpush1.xpose.msra.mxu0 0.0
    %329 = vmatprep.subr.mxu0 0.0
    %330 = vmatpush1.xpose.msra.mxu0 0.0
    %331 = vmatprep.subr.mxu0 0.0
    %332 = vmatpush1.xpose.msra.mxu0 0.0
    %333 = vmatprep.subr.mxu0 0.0
    %334 = vmatpush1.xpose.msra.mxu0 0.0
    %335 = vmatprep.subr.mxu0 0.0
    %336 = vmatpush1.xpose.msra.mxu0 0.0
    %337 = vmatprep.subr.mxu0 0.0
    %338 = vmatpush1.xpose.msra.mxu0 0.0
    %339 = vmatprep.subr.mxu0 0.0
    %340 = vmatpush1.xpose.msra.mxu0 0.0
    %341 = vmatprep.subr.mxu0 0.0
    %342 = vmatpush1.xpose.msra.mxu0 0.0
    %343 = vmatprep.mubr.f32.mxu0 0.0
    %344 = vmatmul.mubr.f32.gmra.mrb[0].mxu0 %v275
    %v345 = vpop.f32.mrb[0].mxu0
    %v346 = vadd.f32 0.0, %v345
    %v347 = vpop.f32.mrb[0].mxu0
    %348 = vdwg.mxu0
    %v349 = vmul.f32 %v191, %v268
    %v350 = vmul.f32 %v191, %v346
    %v351 = vsel %vm195, %v349, -inf
    %352 = vmax.xlane.f32.xlu0 %v351
    %v353 = vpop.xlane.xlu0 %352
    %v354 = vsel %vm195, %v350, -inf
    %355 = vmax.xlane.f32.xlu0 %v354
    %v356 = vpop.xlane.xlu0 %355
    %v357 = vsub.f32 %v349, %v353
    %v358 = vsub.f32 %v350, %v356
    %v359 = vmul.f32 %v357, 1.442695
    %v360 = vpow.pop %v359
    %v361 = vmul.f32 %v358, 1.442695
    %v362 = vpow.pop %v361
    %v363 = vsel %vm195, %v360, 0.0
    %364 = vadd.xlane.f32.xlu0 %v363
    %v365 = vpop.xlane.xlu0 %364
    %v366 = vsel %vm195, %v362, 0.0
    %367 = vadd.xlane.f32.xlu0 %v366
    %v368 = vpop.xlane.xlu0 %367
    %v369 = vrcp.pop %v365
    %v370 = vmul.f32 %v360, %v369
    %v371 = vrcp.pop %v368
    %v372 = vmul.f32 %v362, %v371
    %v373 = vadd.f32 %v370, 0.0
    %v374 = vadd.f32 %v372, 0.0
    %375 = vrot.lane.b32.xlu0 %v181, 64
    %v376 = vpop.permute.xlu0 %375
    %v379 = vsel %vm195, %v370, 0
    %381 = vmatprep.subr.mxu0 0.0
    %382 = vmatpush1.msra.mxu0 %v376
    %383 = vmatprep.subr.mxu0 0.0
    %384 = vmatpush1.msra.mxu0 0.0
    %385 = vmatprep.subr.mxu0 0.0
    %386 = vmatpush1.msra.mxu0 0.0
    %387 = vmatprep.subr.mxu0 0.0
    %388 = vmatpush1.msra.mxu0 0.0
    %389 = vmatprep.subr.mxu0 0.0
    %390 = vmatpush1.msra.mxu0 0.0
    %391 = vmatprep.subr.mxu0 0.0
    %392 = vmatpush1.msra.mxu0 0.0
    %393 = vmatprep.subr.mxu0 0.0
    %394 = vmatpush1.msra.mxu0 0.0
    %395 = vmatprep.subr.mxu0 0.0
    %396 = vmatpush1.msra.mxu0 0.0
    %397 = vmatprep.subr.mxu0 0.0
    %398 = vmatpush1.msra.mxu0 0.0
    %399 = vmatprep.subr.mxu0 0.0
    %400 = vmatpush1.msra.mxu0 0.0
    %401 = vmatprep.subr.mxu0 0.0
    %402 = vmatpush1.msra.mxu0 0.0
    %403 = vmatprep.subr.mxu0 0.0
    %404 = vmatpush1.msra.mxu0 0.0
    %405 = vmatprep.subr.mxu0 0.0
    %406 = vmatpush1.msra.mxu0 0.0
    %407 = vmatprep.subr.mxu0 0.0
    %408 = vmatpush1.msra.mxu0 0.0
    %409 = vmatprep.subr.mxu0 0.0
    %410 = vmatpush1.msra.mxu0 0.0
    %411 = vmatprep.subr.mxu0 0.0
    %412 = vmatpush1.msra.mxu0 0.0
    %413 = vmatprep.subr.mxu0 0.0
    %414 = vmatpush1.msra.mxu0 0.0
    %415 = vmatprep.subr.mxu0 0.0
    %416 = vmatpush1.msra.mxu0 0.0
    %417 = vmatprep.subr.mxu0 0.0
    %418 = vmatpush1.msra.mxu0 0.0
    %419 = vmatprep.subr.mxu0 0.0
    %420 = vmatpush1.msra.mxu0 0.0
    %421 = vmatprep.subr.mxu0 0.0
    %422 = vmatpush1.msra.mxu0 0.0
    %423 = vmatprep.subr.mxu0 0.0
    %424 = vmatpush1.msra.mxu0 0.0
    %425 = vmatprep.subr.mxu0 0.0
    %426 = vmatpush1.msra.mxu0 0.0
    %427 = vmatprep.subr.mxu0 0.0
    %428 = vmatpush1.msra.mxu0 0.0
    %429 = vmatprep.subr.mxu0 0.0
    %430 = vmatpush1.msra.mxu0 0.0
    %431 = vmatprep.subr.mxu0 0.0
    %432 = vmatpush1.msra.mxu0 0.0
    %433 = vmatprep.subr.mxu0 0.0
    %434 = vmatpush1.msra.mxu0 0.0
    %435 = vmatprep.subr.mxu0 0.0
    %436 = vmatpush1.msra.mxu0 0.0
    %437 = vmatprep.subr.mxu0 0.0
    %438 = vmatpush1.msra.mxu0 0.0
    %439 = vmatprep.subr.mxu0 0.0
    %440 = vmatpush1.msra.mxu0 0.0
    %441 = vmatprep.subr.mxu0 0.0
    %442 = vmatpush1.msra.mxu0 0.0
    %443 = vmatprep.subr.mxu0 0.0
    %444 = vmatpush1.msra.mxu0 0.0
    %445 = vmatprep.mubr.f32.mxu0 0.0
    %446 = vmatmul.mubr.f32.gmra.mrb[0].mxu0 %v379
    %v447 = vpop.f32.mrb[0].mxu0
    %v448 = vadd.f32 0.0, %v447
    %v449 = vpop.f32.mrb[0].mxu0
    %450 = vdwg.mxu0
    %451 = vrot.lane.b32.xlu0 %v186, 64
    %v452 = vpop.permute.xlu0 %451
    %v455 = vsel %vm195, %v372, 0
    %457 = vmatprep.subr.mxu0 0.0
    %458 = vmatpush1.msra.mxu0 %v452
    %459 = vmatprep.subr.mxu0 0.0
    %460 = vmatpush1.msra.mxu0 0.0
    %461 = vmatprep.subr.mxu0 0.0
    %462 = vmatpush1.msra.mxu0 0.0
    %463 = vmatprep.subr.mxu0 0.0
    %464 = vmatpush1.msra.mxu0 0.0
    %465 = vmatprep.subr.mxu0 0.0
    %466 = vmatpush1.msra.mxu0 0.0
    %467 = vmatprep.subr.mxu0 0.0
    %468 = vmatpush1.msra.mxu0 0.0
    %469 = vmatprep.subr.mxu0 0.0
    %470 = vmatpush1.msra.mxu0 0.0
    %471 = vmatprep.subr.mxu0 0.0
    %472 = vmatpush1.msra.mxu0 0.0
    %473 = vmatprep.subr.mxu0 0.0
    %474 = vmatpush1.msra.mxu0 0.0
    %475 = vmatprep.subr.mxu0 0.0
    %476 = vmatpush1.msra.mxu0 0.0
    %477 = vmatprep.subr.mxu0 0.0
    %478 = vmatpush1.msra.mxu0 0.0
    %479 = vmatprep.subr.mxu0 0.0
    %480 = vmatpush1.msra.mxu0 0.0
    %481 = vmatprep.subr.mxu0 0.0
    %482 = vmatpush1.msra.mxu0 0.0
    %483 = vmatprep.subr.mxu0 0.0
    %484 = vmatpush1.msra.mxu0 0.0
    %485 = vmatprep.subr.mxu0 0.0
    %486 = vmatpush1.msra.mxu0 0.0
    %487 = vmatprep.subr.mxu0 0.0
    %488 = vmatpush1.msra.mxu0 0.0
    %489 = vmatprep.subr.mxu0 0.0
    %490 = vmatpush1.msra.mxu0 0.0
    %491 = vmatprep.subr.mxu0 0.0
    %492 = vmatpush1.msra.mxu0 0.0
    %493 = vmatprep.subr.mxu0 0.0
    %494 = vmatpush1.msra.mxu0 0.0
    %495 = vmatprep.subr.mxu0 0.0
    %496 = vmatpush1.msra.mxu0 0.0
    %497 = vmatprep.subr.mxu0 0.0
    %498 = vmatpush1.msra.mxu0 0.0
    %499 = vmatprep.subr.mxu0 0.0
    %500 = vmatpush1.msra.mxu0 0.0
    %501 = vmatprep.subr.mxu0 0.0
    %502 = vmatpush1.msra.mxu0 0.0
    %503 = vmatprep.subr.mxu0 0.0
    %504 = vmatpush1.msra.mxu0 0.0
    %505 = vmatprep.subr.mxu0 0.0
    %506 = vmatpush1.msra.mxu0 0.0
    %507 = vmatprep.subr.mxu0 0.0
    %508 = vmatpush1.msra.mxu0 0.0
    %509 = vmatprep.subr.mxu0 0.0
    %510 = vmatpush1.msra.mxu0 0.0
    %511 = vmatprep.subr.mxu0 0.0
    %512 = vmatpush1.msra.mxu0 0.0
    %513 = vmatprep.subr.mxu0 0.0
    %514 = vmatpush1.msra.mxu0 0.0
    %515 = vmatprep.subr.mxu0 0.0
    %516 = vmatpush1.msra.mxu0 0.0
    %517 = vmatprep.subr.mxu0 0.0
    %518 = vmatpush1.msra.mxu0 0.0
    %519 = vmatprep.subr.mxu0 0.0
    %520 = vmatpush1.msra.mxu0 0.0
    %521 = vmatprep.mubr.f32.mxu0 0.0
    %522 = vmatmul.mubr.f32.gmra.mrb[0].mxu0 %v455
    %v523 = vpop.f32.mrb[0].mxu0
    %v524 = vadd.f32 0.0, %v523
    %v525 = vpop.f32.mrb[0].mxu0
    %526 = vdwg.mxu0
    %527 = vrot.lane.b32.xlu0 %v189, 120
    %v528 = vpop.permute.xlu0 %527
    %529 = vrot.lane.b32.xlu0 %v181, 88
    %v530 = vpop.permute.xlu0 %529
    %v531 = vsel %vm195, %v528, 0
    %v533 = vsel %vm195, %v530, 0
    %535 = vmatprep.subr.mxu0 0.0
    %536 = vmatpush1.xpose.msra.mxu0 %v533
    %537 = vmatprep.subr.mxu0 0.0
    %538 = vmatpush1.xpose.msra.mxu0 0.0
    %539 = vmatprep.subr.mxu0 0.0
    %540 = vmatpush1.xpose.msra.mxu0 0.0
    %541 = vmatprep.subr.mxu0 0.0
    %542 = vmatpush1.xpose.msra.mxu0 0.0
    %543 = vmatprep.subr.mxu0 0.0
    %544 = vmatpush1.xpose.msra.mxu0 0.0
    %545 = vmatprep.subr.mxu0 0.0
    %546 = vmatpush1.xpose.msra.mxu0 0.0
    %547 = vmatprep.subr.mxu0 0.0
    %548 = vmatpush1.xpose.msra.mxu0 0.0
    %549 = vmatprep.subr.mxu0 0.0
    %550 = vmatpush1.xpose.msra.mxu0 0.0
    %551 = vmatprep.subr.mxu0 0.0
    %552 = vmatpush1.xpose.msra.mxu0 0.0
    %553 = vmatprep.subr.mxu0 0.0
    %554 = vmatpush1.xpose.msra.mxu0 0.0
    %555 = vmatprep.subr.mxu0 0.0
    %556 = vmatpush1.xpose.msra.mxu0 0.0
    %557 = vmatprep.subr.mxu0 0.0
    %558 = vmatpush1.xpose.msra.mxu0 0.0
    %559 = vmatprep.subr.mxu0 0.0
    %560 = vmatpush1.xpose.msra.mxu0 0.0
    %561 = vmatprep.subr.mxu0 0.0
    %562 = vmatpush1.xpose.msra.mxu0 0.0
    %563 = vmatprep.subr.mxu0 0.0
    %564 = vmatpush1.xpose.msra.mxu0 0.0
    %565 = vmatprep.subr.mxu0 0.0
    %566 = vmatpush1.xpose.msra.mxu0 0.0
    %567 = vmatprep.subr.mxu0 0.0
    %568 = vmatpush1.xpose.msra.mxu0 0.0
    %569 = vmatprep.subr.mxu0 0.0
    %570 = vmatpush1.xpose.msra.mxu0 0.0
    %571 = vmatprep.subr.mxu0 0.0
    %572 = vmatpush1.xpose.msra.mxu0 0.0
    %573 = vmatprep.subr.mxu0 0.0
    %574 = vmatpush1.xpose.msra.mxu0 0.0
    %575 = vmatprep.subr.mxu0 0.0
    %576 = vmatpush1.xpose.msra.mxu0 0.0
    %577 = vmatprep.subr.mxu0 0.0
    %578 = vmatpush1.xpose.msra.mxu0 0.0
    %579 = vmatprep.subr.mxu0 0.0
    %580 = vmatpush1.xpose.msra.mxu0 0.0
    %581 = vmatprep.subr.mxu0 0.0
    %582 = vmatpush1.xpose.msra.mxu0 0.0
    %583 = vmatprep.subr.mxu0 0.0
    %584 = vmatpush1.xpose.msra.mxu0 0.0
    %585 = vmatprep.subr.mxu0 0.0
    %586 = vmatpush1.xpose.msra.mxu0 0.0
    %587 = vmatprep.subr.mxu0 0.0
    %588 = vmatpush1.xpose.msra.mxu0 0.0
    %589 = vmatprep.subr.mxu0 0.0
    %590 = vmatpush1.xpose.msra.mxu0 0.0
    %591 = vmatprep.subr.mxu0 0.0
    %592 = vmatpush1.xpose.msra.mxu0 0.0
    %593 = vmatprep.subr.mxu0 0.0
    %594 = vmatpush1.xpose.msra.mxu0 0.0
    %595 = vmatprep.subr.mxu0 0.0
    %596 = vmatpush1.xpose.msra.mxu0 0.0
    %597 = vmatprep.subr.mxu0 0.0
    %598 = vmatpush1.xpose.msra.mxu0 0.0
    %599 = vmatprep.mubr.f32.mxu0 0.0
    %600 = vmatmul.mubr.f32.gmra.mrb[0].mxu0 %v531
    %v601 = vpop.f32.mrb[0].mxu0
    %v602 = vadd.f32 0.0, %v601
    %v603 = vpop.f32.mrb[0].mxu0
    %604 = vdwg.mxu0
    %605 = vrot.lane.b32.xlu0 %v190, 120
    %v606 = vpop.permute.xlu0 %605
    %607 = vrot.lane.b32.xlu0 %v186, 88
    %v608 = vpop.permute.xlu0 %607
    %v609 = vsel %vm195, %v606, 0
    %v611 = vsel %vm195, %v608, 0
    %613 = vmatprep.subr.mxu0 0.0
    %614 = vmatpush1.xpose.msra.mxu0 %v611
    %615 = vmatprep.subr.mxu0 0.0
    %616 = vmatpush1.xpose.msra.mxu0 0.0
    %617 = vmatprep.subr.mxu0 0.0
    %618 = vmatpush1.xpose.msra.mxu0 0.0
    %619 = vmatprep.subr.mxu0 0.0
    %620 = vmatpush1.xpose.msra.mxu0 0.0
    %621 = vmatprep.subr.mxu0 0.0
    %622 = vmatpush1.xpose.msra.mxu0 0.0
    %623 = vmatprep.subr.mxu0 0.0
    %624 = vmatpush1.xpose.msra.mxu0 0.0
    %625 = vmatprep.subr.mxu0 0.0
    %626 = vmatpush1.xpose.msra.mxu0 0.0
    %627 = vmatprep.subr.mxu0 0.0
    %628 = vmatpush1.xpose.msra.mxu0 0.0
    %629 = vmatprep.subr.mxu0 0.0
    %630 = vmatpush1.xpose.msra.mxu0 0.0
    %631 = vmatprep.subr.mxu0 0.0
    %632 = vmatpush1.xpose.msra.mxu0 0.0
    %633 = vmatprep.subr.mxu0 0.0
    %634 = vmatpush1.xpose.msra.mxu0 0.0
    %635 = vmatprep.subr.mxu0 0.0
    %636 = vmatpush1.xpose.msra.mxu0 0.0
    %637 = vmatprep.subr.mxu0 0.0
    %638 = vmatpush1.xpose.msra.mxu0 0.0
    %639 = vmatprep.subr.mxu0 0.0
    %640 = vmatpush1.xpose.msra.mxu0 0.0
    %641 = vmatprep.subr.mxu0 0.0
    %642 = vmatpush1.xpose.msra.mxu0 0.0
    %643 = vmatprep.subr.mxu0 0.0
    %644 = vmatpush1.xpose.msra.mxu0 0.0
    %645 = vmatprep.subr.mxu0 0.0
    %646 = vmatpush1.xpose.msra.mxu0 0.0
    %647 = vmatprep.subr.mxu0 0.0
    %648 = vmatpush1.xpose.msra.mxu0 0.0
    %649 = vmatprep.subr.mxu0 0.0
    %650 = vmatpush1.xpose.msra.mxu0 0.0
    %651 = vmatprep.subr.mxu0 0.0
    %652 = vmatpush1.xpose.msra.mxu0 0.0
    %653 = vmatprep.subr.mxu0 0.0
    %654 = vmatpush1.xpose.msra.mxu0 0.0
    %655 = vmatprep.subr.mxu0 0.0
    %656 = vmatpush1.xpose.msra.mxu0 0.0
    %657 = vmatprep.subr.mxu0 0.0
    %658 = vmatpush1.xpose.msra.mxu0 0.0
    %659 = vmatprep.subr.mxu0 0.0
    %660 = vmatpush1.xpose.msra.mxu0 0.0
    %661 = vmatprep.subr.mxu0 0.0
    %662 = vmatpush1.xpose.msra.mxu0 0.0
    %663 = vmatprep.subr.mxu0 0.0
    %664 = vmatpush1.xpose.msra.mxu0 0.0
    %665 = vmatprep.subr.mxu0 0.0
    %666 = vmatpush1.xpose.msra.mxu0 0.0
    %667 = vmatprep.subr.mxu0 0.0
    %668 = vmatpush1.xpose.msra.mxu0 0.0
    %669 = vmatprep.subr.mxu0 0.0
    %670 = vmatpush1.xpose.msra.mxu0 0.0
    %671 = vmatprep.subr.mxu0 0.0
    %672 = vmatpush1.xpose.msra.mxu0 0.0
    %673 = vmatprep.subr.mxu0 0.0
    %674 = vmatpush1.xpose.msra.mxu0 0.0
    %675 = vmatprep.subr.mxu0 0.0
    %676 = vmatpush1.xpose.msra.mxu0 0.0
    %677 = vmatprep.mubr.f32.mxu0 0.0
    %678 = vmatmul.mubr.f32.gmra.mrb[0].mxu0 %v609
    %v679 = vpop.f32.mrb[0].mxu0
    %v680 = vadd.f32 0.0, %v679
    %v681 = vpop.f32.mrb[0].mxu0
    %682 = vdwg.mxu0
    %v683 = vmul.f32 %v191, %v602
    %v684 = vmul.f32 %v191, %v680
    %v685 = vsel %vm195, %v683, -inf
    %686 = vmax.xlane.f32.xlu0 %v685
    %v687 = vpop.xlane.xlu0 %686
    %v688 = vsel %vm195, %v684, -inf
    %689 = vmax.xlane.f32.xlu0 %v688
    %v690 = vpop.xlane.xlu0 %689
    %v691 = vsub.f32 %v683, %v687
    %v692 = vsub.f32 %v684, %v690
    %v693 = vmul.f32 %v691, 1.442695
    %v694 = vpow.pop %v693
    %v695 = vmul.f32 %v692, 1.442695
    %v696 = vpow.pop %v695
    %v697 = vsel %vm195, %v694, 0.0
    %698 = vadd.xlane.f32.xlu0 %v697
    %v699 = vpop.xlane.xlu0 %698
    %v700 = vsel %vm195, %v696, 0.0
    %701 = vadd.xlane.f32.xlu0 %v700
    %v702 = vpop.xlane.xlu0 %701
    %v703 = vrcp.pop %v699
    %v704 = vmul.f32 %v694, %v703
    %v705 = vrcp.pop %v702
    %v706 = vmul.f32 %v696, %v705
    %v707 = vadd.f32 %v373, %v704
    %v708 = vadd.f32 %v374, %v706
    %709 = vrot.lane.b32.xlu0 %v181, 56
    %v710 = vpop.permute.xlu0 %709
    %v713 = vsel %vm195, %v704, 0
    %715 = vmatprep.subr.mxu0 0.0
    %716 = vmatpush1.msra.mxu0 %v710
    %717 = vmatprep.subr.mxu0 0.0
    %718 = vmatpush1.msra.mxu0 0.0
    %719 = vmatprep.subr.mxu0 0.0
    %720 = vmatpush1.msra.mxu0 0.0
    %721 = vmatprep.subr.mxu0 0.0
    %722 = vmatpush1.msra.mxu0 0.0
    %723 = vmatprep.subr.mxu0 0.0
    %724 = vmatpush1.msra.mxu0 0.0
    %725 = vmatprep.subr.mxu0 0.0
    %726 = vmatpush1.msra.mxu0 0.0
    %727 = vmatprep.subr.mxu0 0.0
    %728 = vmatpush1.msra.mxu0 0.0
    %729 = vmatprep.subr.mxu0 0.0
    %730 = vmatpush1.msra.mxu0 0.0
    %731 = vmatprep.subr.mxu0 0.0
    %732 = vmatpush1.msra.mxu0 0.0
    %733 = vmatprep.subr.mxu0 0.0
    %734 = vmatpush1.msra.mxu0 0.0
    %735 = vmatprep.subr.mxu0 0.0
    %736 = vmatpush1.msra.mxu0 0.0
    %737 = vmatprep.subr.mxu0 0.0
    %738 = vmatpush1.msra.mxu0 0.0
    %739 = vmatprep.subr.mxu0 0.0
    %740 = vmatpush1.msra.mxu0 0.0
    %741 = vmatprep.subr.mxu0 0.0
    %742 = vmatpush1.msra.mxu0 0.0
    %743 = vmatprep.subr.mxu0 0.0
    %744 = vmatpush1.msra.mxu0 0.0
    %745 = vmatprep.subr.mxu0 0.0
    %746 = vmatpush1.msra.mxu0 0.0
    %747 = vmatprep.subr.mxu0 0.0
    %748 = vmatpush1.msra.mxu0 0.0
    %749 = vmatprep.subr.mxu0 0.0
    %750 = vmatpush1.msra.mxu0 0.0
    %751 = vmatprep.subr.mxu0 0.0
    %752 = vmatpush1.msra.mxu0 0.0
    %753 = vmatprep.subr.mxu0 0.0
    %754 = vmatpush1.msra.mxu0 0.0
    %755 = vmatprep.subr.mxu0 0.0
    %756 = vmatpush1.msra.mxu0 0.0
    %757 = vmatprep.subr.mxu0 0.0
    %758 = vmatpush1.msra.mxu0 0.0
    %759 = vmatprep.subr.mxu0 0.0
    %760 = vmatpush1.msra.mxu0 0.0
    %761 = vmatprep.subr.mxu0 0.0
    %762 = vmatpush1.msra.mxu0 0.0
    %763 = vmatprep.subr.mxu0 0.0
    %764 = vmatpush1.msra.mxu0 0.0
    %765 = vmatprep.subr.mxu0 0.0
    %766 = vmatpush1.msra.mxu0 0.0
    %767 = vmatprep.subr.mxu0 0.0
    %768 = vmatpush1.msra.mxu0 0.0
    %769 = vmatprep.subr.mxu0 0.0
    %770 = vmatpush1.msra.mxu0 0.0
    %771 = vmatprep.subr.mxu0 0.0
    %772 = vmatpush1.msra.mxu0 0.0
    %773 = vmatprep.subr.mxu0 0.0
    %774 = vmatpush1.msra.mxu0 0.0
    %775 = vmatprep.subr.mxu0 0.0
    %776 = vmatpush1.msra.mxu0 0.0
    %777 = vmatprep.subr.mxu0 0.0
    %778 = vmatpush1.msra.mxu0 0.0
    %779 = vmatprep.mubr.f32.mxu0 0.0
    %780 = vmatmul.mubr.f32.gmra.mrb[0].mxu0 %v713
    %v781 = vpop.f32.mrb[0].mxu0
    %v782 = vadd.f32 0.0, %v781
    %v783 = vpop.f32.mrb[0].mxu0
    %784 = vdwg.mxu0
    %785 = vrot.lane.b32.xlu0 %v186, 56
    %v786 = vpop.permute.xlu0 %785
    %v789 = vsel %vm195, %v706, 0
    %791 = vmatprep.subr.mxu0 0.0
    %792 = vmatpush1.msra.mxu0 %v786
    %793 = vmatprep.subr.mxu0 0.0
    %794 = vmatpush1.msra.mxu0 0.0
    %795 = vmatprep.subr.mxu0 0.0
    %796 = vmatpush1.msra.mxu0 0.0
    %797 = vmatprep.subr.mxu0 0.0
    %798 = vmatpush1.msra.mxu0 0.0
    %799 = vmatprep.subr.mxu0 0.0
    %800 = vmatpush1.msra.mxu0 0.0
    %801 = vmatprep.subr.mxu0 0.0
    %802 = vmatpush1.msra.mxu0 0.0
    %803 = vmatprep.subr.mxu0 0.0
    %804 = vmatpush1.msra.mxu0 0.0
    %805 = vmatprep.subr.mxu0 0.0
    %806 = vmatpush1.msra.mxu0 0.0
    %807 = vmatprep.subr.mxu0 0.0
    %808 = vmatpush1.msra.mxu0 0.0
    %809 = vmatprep.subr.mxu0 0.0
    %810 = vmatpush1.msra.mxu0 0.0
    %811 = vmatprep.subr.mxu0 0.0
    %812 = vmatpush1.msra.mxu0 0.0
    %813 = vmatprep.subr.mxu0 0.0
    %814 = vmatpush1.msra.mxu0 0.0
    %815 = vmatprep.subr.mxu0 0.0
    %816 = vmatpush1.msra.mxu0 0.0
    %817 = vmatprep.subr.mxu0 0.0
    %818 = vmatpush1.msra.mxu0 0.0
    %819 = vmatprep.subr.mxu0 0.0
    %820 = vmatpush1.msra.mxu0 0.0
    %821 = vmatprep.subr.mxu0 0.0
    %822 = vmatpush1.msra.mxu0 0.0
    %823 = vmatprep.subr.mxu0 0.0
    %824 = vmatpush1.msra.mxu0 0.0
    %825 = vmatprep.subr.mxu0 0.0
    %826 = vmatpush1.msra.mxu0 0.0
    %827 = vmatprep.subr.mxu0 0.0
    %828 = vmatpush1.msra.mxu0 0.0
    %829 = vmatprep.subr.mxu0 0.0
    %830 = vmatpush1.msra.mxu0 0.0
    %831 = vmatprep.subr.mxu0 0.0
    %832 = vmatpush1.msra.mxu0 0.0
    %833 = vmatprep.subr.mxu0 0.0
    %834 = vmatpush1.msra.mxu0 0.0
    %835 = vmatprep.subr.mxu0 0.0
    %836 = vmatpush1.msra.mxu0 0.0
    %837 = vmatprep.subr.mxu0 0.0
    %838 = vmatpush1.msra.mxu0 0.0
    %839 = vmatprep.subr.mxu0 0.0
    %840 = vmatpush1.msra.mxu0 0.0
    %841 = vmatprep.subr.mxu0 0.0
    %842 = vmatpush1.msra.mxu0 0.0
    %843 = vmatprep.subr.mxu0 0.0
    %844 = vmatpush1.msra.mxu0 0.0
    %845 = vmatprep.subr.mxu0 0.0
    %846 = vmatpush1.msra.mxu0 0.0
    %847 = vmatprep.subr.mxu0 0.0
    %848 = vmatpush1.msra.mxu0 0.0
    %849 = vmatprep.subr.mxu0 0.0
    %850 = vmatpush1.msra.mxu0 0.0
    %851 = vmatprep.subr.mxu0 0.0
    %852 = vmatpush1.msra.mxu0 0.0
    %853 = vmatprep.subr.mxu0 0.0
    %854 = vmatpush1.msra.mxu0 0.0
    %855 = vmatprep.mubr.f32.mxu0 0.0
    %856 = vmatmul.mubr.f32.gmra.mrb[0].mxu0 %v789
    %v857 = vpop.f32.mrb[0].mxu0
    %v858 = vadd.f32 0.0, %v857
    %v859 = vpop.f32.mrb[0].mxu0
    %860 = vdwg.mxu0
    %861 = vrot.lane.b32.xlu0 %v189, 112
    %v862 = vpop.permute.xlu0 %861
    %863 = vrot.lane.b32.xlu0 %v181, 80
    %v864 = vpop.permute.xlu0 %863
    %v865 = vsel %vm195, %v862, 0
    %v867 = vsel %vm195, %v864, 0
    %869 = vmatprep.subr.mxu0 0.0
    %870 = vmatpush1.xpose.msra.mxu0 %v867
    %871 = vmatprep.subr.mxu0 0.0
    %872 = vmatpush1.xpose.msra.mxu0 0.0
    %873 = vmatprep.subr.mxu0 0.0
    %874 = vmatpush1.xpose.msra.mxu0 0.0
    %875 = vmatprep.subr.mxu0 0.0
    %876 = vmatpush1.xpose.msra.mxu0 0.0
    %877 = vmatprep.subr.mxu0 0.0
    %878 = vmatpush1.xpose.msra.mxu0 0.0
    %879 = vmatprep.subr.mxu0 0.0
    %880 = vmatpush1.xpose.msra.mxu0 0.0
    %881 = vmatprep.subr.mxu0 0.0
    %882 = vmatpush1.xpose.msra.mxu0 0.0
    %883 = vmatprep.subr.mxu0 0.0
    %884 = vmatpush1.xpose.msra.mxu0 0.0
    %885 = vmatprep.subr.mxu0 0.0
    %886 = vmatpush1.xpose.msra.mxu0 0.0
    %887 = vmatprep.subr.mxu0 0.0
    %888 = vmatpush1.xpose.msra.mxu0 0.0
    %889 = vmatprep.subr.mxu0 0.0
    %890 = vmatpush1.xpose.msra.mxu0 0.0
    %891 = vmatprep.subr.mxu0 0.0
    %892 = vmatpush1.xpose.msra.mxu0 0.0
    %893 = vmatprep.subr.mxu0 0.0
    %894 = vmatpush1.xpose.msra.mxu0 0.0
    %895 = vmatprep.subr.mxu0 0.0
    %896 = vmatpush1.xpose.msra.mxu0 0.0
    %897 = vmatprep.subr.mxu0 0.0
    %898 = vmatpush1.xpose.msra.mxu0 0.0
    %899 = vmatprep.subr.mxu0 0.0
    %900 = vmatpush1.xpose.msra.mxu0 0.0
    %901 = vmatprep.subr.mxu0 0.0
    %902 = vmatpush1.xpose.msra.mxu0 0.0
    %903 = vmatprep.subr.mxu0 0.0
    %904 = vmatpush1.xpose.msra.mxu0 0.0
    %905 = vmatprep.subr.mxu0 0.0
    %906 = vmatpush1.xpose.msra.mxu0 0.0
    %907 = vmatprep.subr.mxu0 0.0
    %908 = vmatpush1.xpose.msra.mxu0 0.0
    %909 = vmatprep.subr.mxu0 0.0
    %910 = vmatpush1.xpose.msra.mxu0 0.0
    %911 = vmatprep.subr.mxu0 0.0
    %912 = vmatpush1.xpose.msra.mxu0 0.0
    %913 = vmatprep.subr.mxu0 0.0
    %914 = vmatpush1.xpose.msra.mxu0 0.0
    %915 = vmatprep.subr.mxu0 0.0
    %916 = vmatpush1.xpose.msra.mxu0 0.0
    %917 = vmatprep.subr.mxu0 0.0
    %918 = vmatpush1.xpose.msra.mxu0 0.0
    %919 = vmatprep.subr.mxu0 0.0
    %920 = vmatpush1.xpose.msra.mxu0 0.0
    %921 = vmatprep.subr.mxu0 0.0
    %922 = vmatpush1.xpose.msra.mxu0 0.0
    %923 = vmatprep.subr.mxu0 0.0
    %924 = vmatpush1.xpose.msra.mxu0 0.0
    %925 = vmatprep.subr.mxu0 0.0
    %926 = vmatpush1.xpose.msra.mxu0 0.0
    %927 = vmatprep.subr.mxu0 0.0
    %928 = vmatpush1.xpose.msra.mxu0 0.0
    %929 = vmatprep.subr.mxu0 0.0
    %930 = vmatpush1.xpose.msra.mxu0 0.0
    %931 = vmatprep.subr.mxu0 0.0
    %932 = vmatpush1.xpose.msra.mxu0 0.0
    %933 = vmatprep.mubr.f32.mxu0 0.0
    %934 = vmatmul.mubr.f32.gmra.mrb[0].mxu0 %v865
    %v935 = vpop.f32.mrb[0].mxu0
    %v936 = vadd.f32 0.0, %v935
    %v937 = vpop.f32.mrb[0].mxu0
    %938 = vdwg.mxu0
    %939 = vrot.lane.b32.xlu0 %v190, 112
    %v940 = vpop.permute.xlu0 %939
    %941 = vrot.lane.b32.xlu0 %v186, 80
    %v942 = vpop.permute.xlu0 %941
    %v943 = vsel %vm195, %v940, 0
    %v945 = vsel %vm195, %v942, 0
    %947 = vmatprep.subr.mxu0 0.0
    %948 = vmatpush1.xpose.msra.mxu0 %v945
    %949 = vmatprep.subr.mxu0 0.0
    %950 = vmatpush1.xpose.msra.mxu0 0.0
    %951 = vmatprep.subr.mxu0 0.0
    %952 = vmatpush1.xpose.msra.mxu0 0.0
    %953 = vmatprep.subr.mxu0 0.0
    %954 = vmatpush1.xpose.msra.mxu0 0.0
    %955 = vmatprep.subr.mxu0 0.0
    %956 = vmatpush1.xpose.msra.mxu0 0.0
    %957 = vmatprep.subr.mxu0 0.0
    %958 = vmatpush1.xpose.msra.mxu0 0.0
    %959 = vmatprep.subr.mxu0 0.0
    %960 = vmatpush1.xpose.msra.mxu0 0.0
    %961 = vmatprep.subr.mxu0 0.0
    %962 = vmatpush1.xpose.msra.mxu0 0.0
    %963 = vmatprep.subr.mxu0 0.0
    %964 = vmatpush1.xpose.msra.mxu0 0.0
    %965 = vmatprep.subr.mxu0 0.0
    %966 = vmatpush1.xpose.msra.mxu0 0.0
    %967 = vmatprep.subr.mxu0 0.0
    %968 = vmatpush1.xpose.msra.mxu0 0.0
    %969 = vmatprep.subr.mxu0 0.0
    %970 = vmatpush1.xpose.msra.mxu0 0.0
    %971 = vmatprep.subr.mxu0 0.0
    %972 = vmatpush1.xpose.msra.mxu0 0.0
    %973 = vmatprep.subr.mxu0 0.0
    %974 = vmatpush1.xpose.msra.mxu0 0.0
    %975 = vmatprep.subr.mxu0 0.0
    %976 = vmatpush1.xpose.msra.mxu0 0.0
    %977 = vmatprep.subr.mxu0 0.0
    %978 = vmatpush1.xpose.msra.mxu0 0.0
    %979 = vmatprep.subr.mxu0 0.0
    %980 = vmatpush1.xpose.msra.mxu0 0.0
    %981 = vmatprep.subr.mxu0 0.0
    %982 = vmatpush1.xpose.msra.mxu0 0.0
    %983 = vmatprep.subr.mxu0 0.0
    %984 = vmatpush1.xpose.msra.mxu0 0.0
    %985 = vmatprep.subr.mxu0 0.0
    %986 = vmatpush1.xpose.msra.mxu0 0.0
    %987 = vmatprep.subr.mxu0 0.0
    %988 = vmatpush1.xpose.msra.mxu0 0.0
    %989 = vmatprep.subr.mxu0 0.0
    %990 = vmatpush1.xpose.msra.mxu0 0.0
    %991 = vmatprep.subr.mxu0 0.0
    %992 = vmatpush1.xpose.msra.mxu0 0.0
    %993 = vmatprep.subr.mxu0 0.0
    %994 = vmatpush1.xpose.msra.mxu0 0.0
    %995 = vmatprep.subr.mxu0 0.0
    %996 = vmatpush1.xpose.msra.mxu0 0.0
    %997 = vmatprep.subr.mxu0 0.0
    %998 = vmatpush1.xpose.msra.mxu0 0.0
    %999 = vmatprep.subr.mxu0 0.0
    %1000 = vmatpush1.xpose.msra.mxu0 0.0
    %1001 = vmatprep.subr.mxu0 0.0
    %1002 = vmatpush1.xpose.msra.mxu0 0.0
    %1003 = vmatprep.subr.mxu0 0.0
    %1004 = vmatpush1.xpose.msra.mxu0 0.0
    %1005 = vmatprep.subr.mxu0 0.0
    %1006 = vmatpush1.xpose.msra.mxu0 0.0
    %1007 = vmatprep.subr.mxu0 0.0
    %1008 = vmatpush1.xpose.msra.mxu0 0.0
    %1009 = vmatprep.subr.mxu0 0.0
    %1010 = vmatpush1.xpose.msra.mxu0 0.0
    %1011 = vmatprep.mubr.f32.mxu0 0.0
    %1012 = vmatmul.mubr.f32.gmra.mrb[0].mxu0 %v943
    %v1013 = vpop.f32.mrb[0].mxu0
    %v1014 = vadd.f32 0.0, %v1013
    %v1015 = vpop.f32.mrb[0].mxu0
    %1016 = vdwg.mxu0
    %v1017 = vmul.f32 %v191, %v936
    %v1018 = vmul.f32 %v191, %v1014
    %v1019 = vsel %vm195, %v1017, -inf
    %1020 = vmax.xlane.f32.xlu0 %v1019
    %v1021 = vpop.xlane.xlu0 %1020
    %v1022 = vsel %vm195, %v1018, -inf
    %1023 = vmax.xlane.f32.xlu0 %v1022
    %v1024 = vpop.xlane.xlu0 %1023
    %v1025 = vsub.f32 %v1017, %v1021
    %v1026 = vsub.f32 %v1018, %v1024
    %v1027 = vmul.f32 %v1025, 1.442695
    %v1028 = vpow.pop %v1027
    %v1029 = vmul.f32 %v1026, 1.442695
    %v1030 = vpow.pop %v1029
    %v1031 = vsel %vm195, %v1028, 0.0
    %1032 = vadd.xlane.f32.xlu0 %v1031
    %v1033 = vpop.xlane.xlu0 %1032
    %v1034 = vsel %vm195, %v1030, 0.0
    %1035 = vadd.xlane.f32.xlu0 %v1034
    %v1036 = vpop.xlane.xlu0 %1035
    %v1037 = vrcp.pop %v1033
    %v1038 = vmul.f32 %v1028, %v1037
    %v1039 = vrcp.pop %v1036
    %v1040 = vmul.f32 %v1030, %v1039
    %v1041 = vadd.f32 %v707, %v1038
    %v1042 = vadd.f32 %v708, %v1040
    %1043 = vrot.lane.b32.xlu0 %v181, 48
    %v1044 = vpop.permute.xlu0 %1043
    %v1047 = vsel %vm195, %v1038, 0
    %1049 = vmatprep.subr.mxu0 0.0
    %1050 = vmatpush1.msra.mxu0 %v1044
    %1051 = vmatprep.subr.mxu0 0.0
    %1052 = vmatpush1.msra.mxu0 0.0
    %1053 = vmatprep.subr.mxu0 0.0
    %1054 = vmatpush1.msra.mxu0 0.0
    %1055 = vmatprep.subr.mxu0 0.0
    %1056 = vmatpush1.msra.mxu0 0.0
    %1057 = vmatprep.subr.mxu0 0.0
    %1058 = vmatpush1.msra.mxu0 0.0
    %1059 = vmatprep.subr.mxu0 0.0
    %1060 = vmatpush1.msra.mxu0 0.0
    %1061 = vmatprep.subr.mxu0 0.0
    %1062 = vmatpush1.msra.mxu0 0.0
    %1063 = vmatprep.subr.mxu0 0.0
    %1064 = vmatpush1.msra.mxu0 0.0
    %1065 = vmatprep.subr.mxu0 0.0
    %1066 = vmatpush1.msra.mxu0 0.0
    %1067 = vmatprep.subr.mxu0 0.0
    %1068 = vmatpush1.msra.mxu0 0.0
    %1069 = vmatprep.subr.mxu0 0.0
    %1070 = vmatpush1.msra.mxu0 0.0
    %1071 = vmatprep.subr.mxu0 0.0
    %1072 = vmatpush1.msra.mxu0 0.0
    %1073 = vmatprep.subr.mxu0 0.0
    %1074 = vmatpush1.msra.mxu0 0.0
    %1075 = vmatprep.subr.mxu0 0.0
    %1076 = vmatpush1.msra.mxu0 0.0
    %1077 = vmatprep.subr.mxu0 0.0
    %1078 = vmatpush1.msra.mxu0 0.0
    %1079 = vmatprep.subr.mxu0 0.0
    %1080 = vmatpush1.msra.mxu0 0.0
    %1081 = vmatprep.subr.mxu0 0.0
    %1082 = vmatpush1.msra.mxu0 0.0
    %1083 = vmatprep.subr.mxu0 0.0
    %1084 = vmatpush1.msra.mxu0 0.0
    %1085 = vmatprep.subr.mxu0 0.0
    %1086 = vmatpush1.msra.mxu0 0.0
    %1087 = vmatprep.subr.mxu0 0.0
    %1088 = vmatpush1.msra.mxu0 0.0
    %1089 = vmatprep.subr.mxu0 0.0
    %1090 = vmatpush1.msra.mxu0 0.0
    %1091 = vmatprep.subr.mxu0 0.0
    %1092 = vmatpush1.msra.mxu0 0.0
    %1093 = vmatprep.subr.mxu0 0.0
    %1094 = vmatpush1.msra.mxu0 0.0
    %1095 = vmatprep.subr.mxu0 0.0
    %1096 = vmatpush1.msra.mxu0 0.0
    %1097 = vmatprep.subr.mxu0 0.0
    %1098 = vmatpush1.msra.mxu0 0.0
    %1099 = vmatprep.subr.mxu0 0.0
    %1100 = vmatpush1.msra.mxu0 0.0
    %1101 = vmatprep.subr.mxu0 0.0
    %1102 = vmatpush1.msra.mxu0 0.0
    %1103 = vmatprep.subr.mxu0 0.0
    %1104 = vmatpush1.msra.mxu0 0.0
    %1105 = vmatprep.subr.mxu0 0.0
    %1106 = vmatpush1.msra.mxu0 0.0
    %1107 = vmatprep.subr.mxu0 0.0
    %1108 = vmatpush1.msra.mxu0 0.0
    %1109 = vmatprep.subr.mxu0 0.0
    %1110 = vmatpush1.msra.mxu0 0.0
    %1111 = vmatprep.subr.mxu0 0.0
    %1112 = vmatpush1.msra.mxu0 0.0
    %1113 = vmatprep.mubr.f32.mxu0 0.0
    %1114 = vmatmul.mubr.f32.gmra.mrb[0].mxu0 %v1047
    %v1115 = vpop.f32.mrb[0].mxu0
    %v1116 = vadd.f32 0.0, %v1115
    %v1117 = vpop.f32.mrb[0].mxu0
    %1118 = vdwg.mxu0
    %1119 = vrot.lane.b32.xlu0 %v186, 48
    %v1120 = vpop.permute.xlu0 %1119
    %v1123 = vsel %vm195, %v1040, 0
    %1125 = vmatprep.subr.mxu0 0.0
    %1126 = vmatpush1.msra.mxu0 %v1120
    %1127 = vmatprep.subr.mxu0 0.0
    %1128 = vmatpush1.msra.mxu0 0.0
    %1129 = vmatprep.subr.mxu0 0.0
    %1130 = vmatpush1.msra.mxu0 0.0
    %1131 = vmatprep.subr.mxu0 0.0
    %1132 = vmatpush1.msra.mxu0 0.0
    %1133 = vmatprep.subr.mxu0 0.0
    %1134 = vmatpush1.msra.mxu0 0.0
    %1135 = vmatprep.subr.mxu0 0.0
    %1136 = vmatpush1.msra.mxu0 0.0
    %1137 = vmatprep.subr.mxu0 0.0
    %1138 = vmatpush1.msra.mxu0 0.0
    %1139 = vmatprep.subr.mxu0 0.0
    %1140 = vmatpush1.msra.mxu0 0.0
    %1141 = vmatprep.subr.mxu0 0.0
    %1142 = vmatpush1.msra.mxu0 0.0
    %1143 = vmatprep.subr.mxu0 0.0
    %1144 = vmatpush1.msra.mxu0 0.0
    %1145 = vmatprep.subr.mxu0 0.0
    %1146 = vmatpush1.msra.mxu0 0.0
    %1147 = vmatprep.subr.mxu0 0.0
    %1148 = vmatpush1.msra.mxu0 0.0
    %1149 = vmatprep.subr.mxu0 0.0
    %1150 = vmatpush1.msra.mxu0 0.0
    %1151 = vmatprep.subr.mxu0 0.0
    %1152 = vmatpush1.msra.mxu0 0.0
    %1153 = vmatprep.subr.mxu0 0.0
    %1154 = vmatpush1.msra.mxu0 0.0
    %1155 = vmatprep.subr.mxu0 0.0
    %1156 = vmatpush1.msra.mxu0 0.0
    %1157 = vmatprep.subr.mxu0 0.0
    %1158 = vmatpush1.msra.mxu0 0.0
    %1159 = vmatprep.subr.mxu0 0.0
    %1160 = vmatpush1.msra.mxu0 0.0
    %1161 = vmatprep.subr.mxu0 0.0
    %1162 = vmatpush1.msra.mxu0 0.0
    %1163 = vmatprep.subr.mxu0 0.0
    %1164 = vmatpush1.msra.mxu0 0.0
    %1165 = vmatprep.subr.mxu0 0.0
    %1166 = vmatpush1.msra.mxu0 0.0
    %1167 = vmatprep.subr.mxu0 0.0
    %1168 = vmatpush1.msra.mxu0 0.0
    %1169 = vmatprep.subr.mxu0 0.0
    %1170 = vmatpush1.msra.mxu0 0.0
    %1171 = vmatprep.subr.mxu0 0.0
    %1172 = vmatpush1.msra.mxu0 0.0
    %1173 = vmatprep.subr.mxu0 0.0
    %1174 = vmatpush1.msra.mxu0 0.0
    %1175 = vmatprep.subr.mxu0 0.0
    %1176 = vmatpush1.msra.mxu0 0.0
    %1177 = vmatprep.subr.mxu0 0.0
    %1178 = vmatpush1.msra.mxu0 0.0
    %1179 = vmatprep.subr.mxu0 0.0
    %1180 = vmatpush1.msra.mxu0 0.0
    %1181 = vmatprep.subr.mxu0 0.0
    %1182 = vmatpush1.msra.mxu0 0.0
    %1183 = vmatprep.subr.mxu0 0.0
    %1184 = vmatpush1.msra.mxu0 0.0
    %1185 = vmatprep.subr.mxu0 0.0
    %1186 = vmatpush1.msra.mxu0 0.0
    %1187 = vmatprep.subr.mxu0 0.0
    %1188 = vmatpush1.msra.mxu0 0.0
    %1189 = vmatprep.mubr.f32.mxu0 0.0
    %1190 = vmatmul.mubr.f32.gmra.mrb[0].mxu0 %v1123
    %v1191 = vpop.f32.mrb[0].mxu0
    %v1192 = vadd.f32 0.0, %v1191
    %v1193 = vpop.f32.mrb[0].mxu0
    %1194 = vdwg.mxu0
    %1195 = vrot.lane.b32.xlu0 %v189, 104
    %v1196 = vpop.permute.xlu0 %1195
    %1197 = vrot.lane.b32.xlu0 %v181, 72
    %v1198 = vpop.permute.xlu0 %1197
    %v1199 = vsel %vm195, %v1196, 0
    %v1201 = vsel %vm195, %v1198, 0
    %1203 = vmatprep.subr.mxu0 0.0
    %1204 = vmatpush1.xpose.msra.mxu0 %v1201
    %1205 = vmatprep.subr.mxu0 0.0
    %1206 = vmatpush1.xpose.msra.mxu0 0.0
    %1207 = vmatprep.subr.mxu0 0.0
    %1208 = vmatpush1.xpose.msra.mxu0 0.0
    %1209 = vmatprep.subr.mxu0 0.0
    %1210 = vmatpush1.xpose.msra.mxu0 0.0
    %1211 = vmatprep.subr.mxu0 0.0
    %1212 = vmatpush1.xpose.msra.mxu0 0.0
    %1213 = vmatprep.subr.mxu0 0.0
    %1214 = vmatpush1.xpose.msra.mxu0 0.0
    %1215 = vmatprep.subr.mxu0 0.0
    %1216 = vmatpush1.xpose.msra.mxu0 0.0
    %1217 = vmatprep.subr.mxu0 0.0
    %1218 = vmatpush1.xpose.msra.mxu0 0.0
    %1219 = vmatprep.subr.mxu0 0.0
    %1220 = vmatpush1.xpose.msra.mxu0 0.0
    %1221 = vmatprep.subr.mxu0 0.0
    %1222 = vmatpush1.xpose.msra.mxu0 0.0
    %1223 = vmatprep.subr.mxu0 0.0
    %1224 = vmatpush1.xpose.msra.mxu0 0.0
    %1225 = vmatprep.subr.mxu0 0.0
    %1226 = vmatpush1.xpose.msra.mxu0 0.0
    %1227 = vmatprep.subr.mxu0 0.0
    %1228 = vmatpush1.xpose.msra.mxu0 0.0
    %1229 = vmatprep.subr.mxu0 0.0
    %1230 = vmatpush1.xpose.msra.mxu0 0.0
    %1231 = vmatprep.subr.mxu0 0.0
    %1232 = vmatpush1.xpose.msra.mxu0 0.0
    %1233 = vmatprep.subr.mxu0 0.0
    %1234 = vmatpush1.xpose.msra.mxu0 0.0
    %1235 = vmatprep.subr.mxu0 0.0
    %1236 = vmatpush1.xpose.msra.mxu0 0.0
    %1237 = vmatprep.subr.mxu0 0.0
    %1238 = vmatpush1.xpose.msra.mxu0 0.0
    %1239 = vmatprep.subr.mxu0 0.0
    %1240 = vmatpush1.xpose.msra.mxu0 0.0
    %1241 = vmatprep.subr.mxu0 0.0
    %1242 = vmatpush1.xpose.msra.mxu0 0.0
    %1243 = vmatprep.subr.mxu0 0.0
    %1244 = vmatpush1.xpose.msra.mxu0 0.0
    %1245 = vmatprep.subr.mxu0 0.0
    %1246 = vmatpush1.xpose.msra.mxu0 0.0
    %1247 = vmatprep.subr.mxu0 0.0
    %1248 = vmatpush1.xpose.msra.mxu0 0.0
    %1249 = vmatprep.subr.mxu0 0.0
    %1250 = vmatpush1.xpose.msra.mxu0 0.0
    %1251 = vmatprep.subr.mxu0 0.0
    %1252 = vmatpush1.xpose.msra.mxu0 0.0
    %1253 = vmatprep.subr.mxu0 0.0
    %1254 = vmatpush1.xpose.msra.mxu0 0.0
    %1255 = vmatprep.subr.mxu0 0.0
    %1256 = vmatpush1.xpose.msra.mxu0 0.0
    %1257 = vmatprep.subr.mxu0 0.0
    %1258 = vmatpush1.xpose.msra.mxu0 0.0
    %1259 = vmatprep.subr.mxu0 0.0
    %1260 = vmatpush1.xpose.msra.mxu0 0.0
    %1261 = vmatprep.subr.mxu0 0.0
    %1262 = vmatpush1.xpose.msra.mxu0 0.0
    %1263 = vmatprep.subr.mxu0 0.0
    %1264 = vmatpush1.xpose.msra.mxu0 0.0
    %1265 = vmatprep.subr.mxu0 0.0
    %1266 = vmatpush1.xpose.msra.mxu0 0.0
    %1267 = vmatprep.mubr.f32.mxu0 0.0
    %1268 = vmatmul.mubr.f32.gmra.mrb[0].mxu0 %v1199
    %v1269 = vpop.f32.mrb[0].mxu0
    %v1270 = vadd.f32 0.0, %v1269
    %v1271 = vpop.f32.mrb[0].mxu0
    %1272 = vdwg.mxu0
    %1273 = vrot.lane.b32.xlu0 %v190, 104
    %v1274 = vpop.permute.xlu0 %1273
    %1275 = vrot.lane.b32.xlu0 %v186, 72
    %v1276 = vpop.permute.xlu0 %1275
    %v1277 = vsel %vm195, %v1274, 0
    %v1279 = vsel %vm195, %v1276, 0
    %1281 = vmatprep.subr.mxu0 0.0
    %1282 = vmatpush1.xpose.msra.mxu0 %v1279
    %1283 = vmatprep.subr.mxu0 0.0
    %1284 = vmatpush1.xpose.msra.mxu0 0.0
    %1285 = vmatprep.subr.mxu0 0.0
    %1286 = vmatpush1.xpose.msra.mxu0 0.0
    %1287 = vmatprep.subr.mxu0 0.0
    %1288 = vmatpush1.xpose.msra.mxu0 0.0
    %1289 = vmatprep.subr.mxu0 0.0
    %1290 = vmatpush1.xpose.msra.mxu0 0.0
    %1291 = vmatprep.subr.mxu0 0.0
    %1292 = vmatpush1.xpose.msra.mxu0 0.0
    %1293 = vmatprep.subr.mxu0 0.0
    %1294 = vmatpush1.xpose.msra.mxu0 0.0
    %1295 = vmatprep.subr.mxu0 0.0
    %1296 = vmatpush1.xpose.msra.mxu0 0.0
    %1297 = vmatprep.subr.mxu0 0.0
    %1298 = vmatpush1.xpose.msra.mxu0 0.0
    %1299 = vmatprep.subr.mxu0 0.0
    %1300 = vmatpush1.xpose.msra.mxu0 0.0
    %1301 = vmatprep.subr.mxu0 0.0
    %1302 = vmatpush1.xpose.msra.mxu0 0.0
    %1303 = vmatprep.subr.mxu0 0.0
    %1304 = vmatpush1.xpose.msra.mxu0 0.0
    %1305 = vmatprep.subr.mxu0 0.0
    %1306 = vmatpush1.xpose.msra.mxu0 0.0
    %1307 = vmatprep.subr.mxu0 0.0
    %1308 = vmatpush1.xpose.msra.mxu0 0.0
    %1309 = vmatprep.subr.mxu0 0.0
    %1310 = vmatpush1.xpose.msra.mxu0 0.0
    %1311 = vmatprep.subr.mxu0 0.0
    %1312 = vmatpush1.xpose.msra.mxu0 0.0
    %1313 = vmatprep.subr.mxu0 0.0
    %1314 = vmatpush1.xpose.msra.mxu0 0.0
    %1315 = vmatprep.subr.mxu0 0.0
    %1316 = vmatpush1.xpose.msra.mxu0 0.0
    %1317 = vmatprep.subr.mxu0 0.0
    %1318 = vmatpush1.xpose.msra.mxu0 0.0
    %1319 = vmatprep.subr.mxu0 0.0
    %1320 = vmatpush1.xpose.msra.mxu0 0.0
    %1321 = vmatprep.subr.mxu0 0.0
    %1322 = vmatpush1.xpose.msra.mxu0 0.0
    %1323 = vmatprep.subr.mxu0 0.0
    %1324 = vmatpush1.xpose.msra.mxu0 0.0
    %1325 = vmatprep.subr.mxu0 0.0
    %1326 = vmatpush1.xpose.msra.mxu0 0.0
    %1327 = vmatprep.subr.mxu0 0.0
    %1328 = vmatpush1.xpose.msra.mxu0 0.0
    %1329 = vmatprep.subr.mxu0 0.0
    %1330 = vmatpush1.xpose.msra.mxu0 0.0
    %1331 = vmatprep.subr.mxu0 0.0
    %1332 = vmatpush1.xpose.msra.mxu0 0.0
    %1333 = vmatprep.subr.mxu0 0.0
    %1334 = vmatpush1.xpose.msra.mxu0 0.0
    %1335 = vmatprep.subr.mxu0 0.0
    %1336 = vmatpush1.xpose.msra.mxu0 0.0
    %1337 = vmatprep.subr.mxu0 0.0
    %1338 = vmatpush1.xpose.msra.mxu0 0.0
    %1339 = vmatprep.subr.mxu0 0.0
    %1340 = vmatpush1.xpose.msra.mxu0 0.0
    %1341 = vmatprep.subr.mxu0 0.0
    %1342 = vmatpush1.xpose.msra.mxu0 0.0
    %1343 = vmatprep.subr.mxu0 0.0
    %1344 = vmatpush1.xpose.msra.mxu0 0.0
    %1345 = vmatprep.mubr.f32.mxu0 0.0
    %1346 = vmatmul.mubr.f32.gmra.mrb[0].mxu0 %v1277
    %v1347 = vpop.f32.mrb[0].mxu0
    %v1348 = vadd.f32 0.0, %v1347
    %v1349 = vpop.f32.mrb[0].mxu0
    %1350 = vdwg.mxu0
    %v1351 = vmul.f32 %v191, %v1270
    %v1352 = vmul.f32 %v191, %v1348
    %v1353 = vsel %vm195, %v1351, -inf
    %1354 = vmax.xlane.f32.xlu0 %v1353
    %v1355 = vpop.xlane.xlu0 %1354
    %v1356 = vsel %vm195, %v1352, -inf
    %1357 = vmax.xlane.f32.xlu0 %v1356
    %v1358 = vpop.xlane.xlu0 %1357
    %v1359 = vsub.f32 %v1351, %v1355
    %v1360 = vsub.f32 %v1352, %v1358
    %v1361 = vmul.f32 %v1359, 1.442695
    %v1362 = vpow.pop %v1361
    %v1363 = vmul.f32 %v1360, 1.442695
    %v1364 = vpow.pop %v1363
    %v1365 = vsel %vm195, %v1362, 0.0
    %1366 = vadd.xlane.f32.xlu0 %v1365
    %v1367 = vpop.xlane.xlu0 %1366
    %v1368 = vsel %vm195, %v1364, 0.0
    %1369 = vadd.xlane.f32.xlu0 %v1368
    %v1370 = vpop.xlane.xlu0 %1369
    %v1371 = vrcp.pop %v1367
    %v1372 = vmul.f32 %v1362, %v1371
    %v1373 = vrcp.pop %v1370
    %v1374 = vmul.f32 %v1364, %v1373
    %v1375 = vadd.f32 %v1041, %v1372
    %v1376 = vadd.f32 %v1042, %v1374
    %1377 = vrot.lane.b32.xlu0 %v181, 40
    %v1378 = vpop.permute.xlu0 %1377
    %v1381 = vsel %vm195, %v1372, 0
    %1383 = vmatprep.subr.mxu0 0.0
    %1384 = vmatpush1.msra.mxu0 %v1378
    %1385 = vmatprep.subr.mxu0 0.0
    %1386 = vmatpush1.msra.mxu0 0.0
    %1387 = vmatprep.subr.mxu0 0.0
    %1388 = vmatpush1.msra.mxu0 0.0
    %1389 = vmatprep.subr.mxu0 0.0
    %1390 = vmatpush1.msra.mxu0 0.0
    %1391 = vmatprep.subr.mxu0 0.0
    %1392 = vmatpush1.msra.mxu0 0.0
    %1393 = vmatprep.subr.mxu0 0.0
    %1394 = vmatpush1.msra.mxu0 0.0
    %1395 = vmatprep.subr.mxu0 0.0
    %1396 = vmatpush1.msra.mxu0 0.0
    %1397 = vmatprep.subr.mxu0 0.0
    %1398 = vmatpush1.msra.mxu0 0.0
    %1399 = vmatprep.subr.mxu0 0.0
    %1400 = vmatpush1.msra.mxu0 0.0
    %1401 = vmatprep.subr.mxu0 0.0
    %1402 = vmatpush1.msra.mxu0 0.0
    %1403 = vmatprep.subr.mxu0 0.0
    %1404 = vmatpush1.msra.mxu0 0.0
    %1405 = vmatprep.subr.mxu0 0.0
    %1406 = vmatpush1.msra.mxu0 0.0
    %1407 = vmatprep.subr.mxu0 0.0
    %1408 = vmatpush1.msra.mxu0 0.0
    %1409 = vmatprep.subr.mxu0 0.0
    %1410 = vmatpush1.msra.mxu0 0.0
    %1411 = vmatprep.subr.mxu0 0.0
    %1412 = vmatpush1.msra.mxu0 0.0
    %1413 = vmatprep.subr.mxu0 0.0
    %1414 = vmatpush1.msra.mxu0 0.0
    %1415 = vmatprep.subr.mxu0 0.0
    %1416 = vmatpush1.msra.mxu0 0.0
    %1417 = vmatprep.subr.mxu0 0.0
    %1418 = vmatpush1.msra.mxu0 0.0
    %1419 = vmatprep.subr.mxu0 0.0
    %1420 = vmatpush1.msra.mxu0 0.0
    %1421 = vmatprep.subr.mxu0 0.0
    %1422 = vmatpush1.msra.mxu0 0.0
    %1423 = vmatprep.subr.mxu0 0.0
    %1424 = vmatpush1.msra.mxu0 0.0
    %1425 = vmatprep.subr.mxu0 0.0
    %1426 = vmatpush1.msra.mxu0 0.0
    %1427 = vmatprep.subr.mxu0 0.0
    %1428 = vmatpush1.msra.mxu0 0.0
    %1429 = vmatprep.subr.mxu0 0.0
    %1430 = vmatpush1.msra.mxu0 0.0
    %1431 = vmatprep.subr.mxu0 0.0
    %1432 = vmatpush1.msra.mxu0 0.0
    %1433 = vmatprep.subr.mxu0 0.0
    %1434 = vmatpush1.msra.mxu0 0.0
    %1435 = vmatprep.subr.mxu0 0.0
    %1436 = vmatpush1.msra.mxu0 0.0
    %1437 = vmatprep.subr.mxu0 0.0
    %1438 = vmatpush1.msra.mxu0 0.0
    %1439 = vmatprep.subr.mxu0 0.0
    %1440 = vmatpush1.msra.mxu0 0.0
    %1441 = vmatprep.subr.mxu0 0.0
    %1442 = vmatpush1.msra.mxu0 0.0
    %1443 = vmatprep.subr.mxu0 0.0
    %1444 = vmatpush1.msra.mxu0 0.0
    %1445 = vmatprep.subr.mxu0 0.0
    %1446 = vmatpush1.msra.mxu0 0.0
    %1447 = vmatprep.mubr.f32.mxu0 0.0
    %1448 = vmatmul.mubr.f32.gmra.mrb[0].mxu0 %v1381
    %v1449 = vpop.f32.mrb[0].mxu0
    %v1450 = vadd.f32 0.0, %v1449
    %v1451 = vpop.f32.mrb[0].mxu0
    %1452 = vdwg.mxu0
    %1453 = vrot.lane.b32.xlu0 %v186, 40
    %v1454 = vpop.permute.xlu0 %1453
    %v1457 = vsel %vm195, %v1374, 0
    %1459 = vmatprep.subr.mxu0 0.0
    %1460 = vmatpush1.msra.mxu0 %v1454
    %1461 = vmatprep.subr.mxu0 0.0
    %1462 = vmatpush1.msra.mxu0 0.0
    %1463 = vmatprep.subr.mxu0 0.0
    %1464 = vmatpush1.msra.mxu0 0.0
    %1465 = vmatprep.subr.mxu0 0.0
    %1466 = vmatpush1.msra.mxu0 0.0
    %1467 = vmatprep.subr.mxu0 0.0
    %1468 = vmatpush1.msra.mxu0 0.0
    %1469 = vmatprep.subr.mxu0 0.0
    %1470 = vmatpush1.msra.mxu0 0.0
    %1471 = vmatprep.subr.mxu0 0.0
    %1472 = vmatpush1.msra.mxu0 0.0
    %1473 = vmatprep.subr.mxu0 0.0
    %1474 = vmatpush1.msra.mxu0 0.0
    %1475 = vmatprep.subr.mxu0 0.0
    %1476 = vmatpush1.msra.mxu0 0.0
    %1477 = vmatprep.subr.mxu0 0.0
    %1478 = vmatpush1.msra.mxu0 0.0
    %1479 = vmatprep.subr.mxu0 0.0
    %1480 = vmatpush1.msra.mxu0 0.0
    %1481 = vmatprep.subr.mxu0 0.0
    %1482 = vmatpush1.msra.mxu0 0.0
    %1483 = vmatprep.subr.mxu0 0.0
    %1484 = vmatpush1.msra.mxu0 0.0
    %1485 = vmatprep.subr.mxu0 0.0
    %1486 = vmatpush1.msra.mxu0 0.0
    %1487 = vmatprep.subr.mxu0 0.0
    %1488 = vmatpush1.msra.mxu0 0.0
    %1489 = vmatprep.subr.mxu0 0.0
    %1490 = vmatpush1.msra.mxu0 0.0
    %1491 = vmatprep.subr.mxu0 0.0
    %1492 = vmatpush1.msra.mxu0 0.0
    %1493 = vmatprep.subr.mxu0 0.0
    %1494 = vmatpush1.msra.mxu0 0.0
    %1495 = vmatprep.subr.mxu0 0.0
    %1496 = vmatpush1.msra.mxu0 0.0
    %1497 = vmatprep.subr.mxu0 0.0
    %1498 = vmatpush1.msra.mxu0 0.0
    %1499 = vmatprep.subr.mxu0 0.0
    %1500 = vmatpush1.msra.mxu0 0.0
    %1501 = vmatprep.subr.mxu0 0.0
    %1502 = vmatpush1.msra.mxu0 0.0
    %1503 = vmatprep.subr.mxu0 0.0
    %1504 = vmatpush1.msra.mxu0 0.0
    %1505 = vmatprep.subr.mxu0 0.0
    %1506 = vmatpush1.msra.mxu0 0.0
    %1507 = vmatprep.subr.mxu0 0.0
    %1508 = vmatpush1.msra.mxu0 0.0
    %1509 = vmatprep.subr.mxu0 0.0
    %1510 = vmatpush1.msra.mxu0 0.0
    %1511 = vmatprep.subr.mxu0 0.0
    %1512 = vmatpush1.msra.mxu0 0.0
    %1513 = vmatprep.subr.mxu0 0.0
    %1514 = vmatpush1.msra.mxu0 0.0
    %1515 = vmatprep.subr.mxu0 0.0
    %1516 = vmatpush1.msra.mxu0 0.0
    %1517 = vmatprep.subr.mxu0 0.0
    %1518 = vmatpush1.msra.mxu0 0.0
    %1519 = vmatprep.subr.mxu0 0.0
    %1520 = vmatpush1.msra.mxu0 0.0
    %1521 = vmatprep.subr.mxu0 0.0
    %1522 = vmatpush1.msra.mxu0 0.0
    %1523 = vmatprep.mubr.f32.mxu0 0.0
    %1524 = vmatmul.mubr.f32.gmra.mrb[0].mxu0 %v1457
    %v1525 = vpop.f32.mrb[0].mxu0
    %v1526 = vadd.f32 0.0, %v1525
    %v1527 = vpop.f32.mrb[0].mxu0
    %1528 = vdwg.mxu0
    %1531 = vrot.lane.b32.xlu0 %v782, 8
    %v1532 = vpop.permute.xlu0 %1531
    %1533 = vrot.lane.b32.xlu0 %v858, 8
    %v1534 = vpop.permute.xlu0 %1533
    %1539 = vrot.lane.b32.xlu0 %v1116, 16
    %v1540 = vpop.permute.xlu0 %1539
    %1541 = vrot.lane.b32.xlu0 %v1192, 16
    %v1542 = vpop.permute.xlu0 %1541
    %1547 = vrot.lane.b32.xlu0 %v1450, 24
    %v1548 = vpop.permute.xlu0 %1547
    %1549 = vrot.lane.b32.xlu0 %v1526, 24
    %v1550 = vpop.permute.xlu0 %1549
    %v1553 = vsel %vm195, %v448, %v1532
    %v1554 = vsel %vm195, %v524, %v1534
    %vm1555 = vcmask 130048
    %v1556 = vsel %vm1555, %v1553, %v1540
    %v1557 = vsel %vm1555, %v1554, %v1542
    %vm1558 = vcmask 195584
    %v1559 = vsel %vm1558, %v1556, %v1548
    %v1560 = vsel %vm1558, %v1557, %v1550
    %1561 = vst.msk [vmem:[#allocation10] sm:$0xff] %vm84, %v1559
    %1562 = vst.msk [vmem:[#allocation10 + $0x8] sm:$0xff] %vm84, %v1560
    %v1563 = vmul.f32 %v1375, 0.25
    %v1564 = vmul.f32 %v1376, 0.25
    %1565 = vst.msk [vmem:[%s6] sm:$0xff] %vm195, %v1563
    %1566 = vst.msk [vmem:[%s6 + $0x8] sm:$0xff] %vm195, %v1564
    // Predicated region
    $region38: #{tpu_custom_call.1} parent=1 // pred_check
      _
    $region39: #{tpu_custom_call.1} parent=1 // pred_check_branch
      %1568 = sbr.rel (0) target = $region41
    $region40: #{tpu_custom_call.1} parent=1 // pred_region
      %s1570 = ssub.s32 256, 256
      %1571 = vsyncadd [#allocation4], %s1570
      %s1572 = sshll.u32 [#allocation10], 4
      %s1573 = int_to_ptr.vmem [resolvable:$true] %s1572
      %1578 = dma.vmem_to_hbm [thread:$0]  %s1573, 256, %s5, [#allocation4], 128, 128, 8
    $region41: #{tpu_custom_call.1} parent=1 // pred_fallthru
      _
    // Predicated region
    $region42: #{tpu_custom_call.1} parent=1 // pred_check
      _
    $region43: #{tpu_custom_call.1} parent=1 // pred_check_branch
      %1580 = sbr.rel (0) target = $region45
    $region44: #{tpu_custom_call.1} parent=1 // pred_region
      _
    $region45: #{tpu_custom_call.1} parent=1 // pred_fallthru
      _
    // Predicated region
    $region46: #{tpu_custom_call.1} parent=1 // pred_check
      _
    $region47: #{tpu_custom_call.1} parent=1 // pred_check_branch
      %1582 = sbr.rel (0) target = $region49
    $region48: #{tpu_custom_call.1} parent=1 // pred_region
      %1583 = dma.done [#allocation4], 256
    $region49: #{tpu_custom_call.1} parent=1 // pred_fallthru
      _
    // Predicated region
    $region50: #{tpu_custom_call.1} parent=1 // pred_check
      _
    $region51: #{tpu_custom_call.1} parent=1 // pred_check_branch
      %1585 = sbr.rel (0) target = $region53
    $region52: #{tpu_custom_call.1} parent=1 // pred_region
      _
    $region53: #{tpu_custom_call.1} parent=1 // pred_fallthru
      _
    %1586 = vsyncpa [#allocation3], 1
    %1587 = vsyncpa [#allocation6], 1
    %1588 = vsyncpa [#allocation9], 1
    %1589 = vsyncpa [#allocation4], 1

</llo_original>
